<compile_context>
chip_gen: v7x
topology: tpu7x:2x2x1
jax: 0.10.0
libtpu: 0.0.40
codegen_flags: <defaults>
</compile_context>

<pallas_src>
import functools
import math

import jax
import jax.numpy as jnp
from jax.experimental import pallas as pl
from jax.experimental.pallas import tpu as pltpu


# ----------------------------------------------------------------------------
# Fused 2-layer GAT kernel (one batched graph per grid step)
# ----------------------------------------------------------------------------
def _fused_gat2_kernel(x_ref, mbias_ref, w1c_ref, ap1s_ref, b1_ref,
                       w2c_ref, ap2s_ref, b2_ref, o_ref,
                       *, heads, hidden, out_ch, slope, mm_dtype):
    f32 = jnp.float32
    n = x_ref.shape[1]

    x = x_ref[0]                                  # (N, in)
    xq = x.astype(mm_dtype)

    # Additive mask bias (0 on edges incl. self loops, -1e30 elsewhere), hoisted:
    # loaded once, used by every head of layer 1 and by layer 2.
    mbias = mbias_ref[...].astype(f32)            # (N_tgt, N_src)

    def sigmoid(v):                               # exact, single EUP op (tanh form)
        return 0.5 * (jnp.tanh(0.5 * v) + 1.0)

    def edge_softmax(e):
        # e: raw (N_tgt, N_src) attention logits.
        e = jnp.where(e >= 0, e, e * slope) + mbias          # LeakyReLU(0.2) + mask
        e = e - jnp.max(e, axis=-1, keepdims=True)
        p = jnp.exp(e)                                       # masked entries -> 0
        inv = pl.reciprocal(jnp.sum(p, axis=-1, keepdims=True), approx=True)
        return p * inv

    # Layer-1 src logits for ALL heads in one small matmul:
    # (heads,in) x (N,in) contracting the minor dims -> (heads, N); row h is the
    # src-node score of head h, already in lane (row-vector) layout.
    s1_src = jax.lax.dot_general(ap1s_ref[...], xq, (((1,), (1,)), ((), ())),
                                 preferred_element_type=f32)

    # Layer-2 accumulators (no (N, heads*hidden) scratch slab).
    acc2 = jnp.zeros((n, out_ch + 1), f32)        # [:, :out] = z2, [:, out] = dst logit
    s2_src = jnp.zeros((1, n), f32)               # layer-2 src logits (row layout)

    for h in range(heads):                        # static unroll, tiny head count
        # Head features and dst logit from ONE matmul (dst column folded into w1c).
        zc = jnp.dot(xq, w1c_ref[h], preferred_element_type=f32)    # (N, hidden+1)
        zh = zc[:, :hidden]                                          # (N, hidden)
        e1 = zc[:, hidden:hidden + 1] + s1_src[h:h + 1, :]           # dst col + src row
        alpha1 = edge_softmax(e1)                                    # (N_tgt, N_src)
        agg = jnp.dot(alpha1, zh, preferred_element_type=f32)        # f32 aggregation
        h1_h = sigmoid(agg + b1_ref[h])                              # bias + sigmoid
        h1_q = h1_h.astype(mm_dtype)                                 # dropout = identity
        # Accumulate layer-2 features + dst logit, and layer-2 src logits, per head.
        acc2 = acc2 + jnp.dot(h1_q, w2c_ref[h], preferred_element_type=f32)
        s2_src = s2_src + jax.lax.dot_general(ap2s_ref[h], h1_q,
                                              (((1,), (1,)), ((), ())),
                                              preferred_element_type=f32)

    # ------------------------- GAT layer 2 (single head) -------------------------
    e2 = acc2[:, out_ch:out_ch + 1] + s2_src
    alpha2 = edge_softmax(e2)
    out2 = jnp.dot(alpha2, acc2[:, :out_ch], preferred_element_type=f32) + b2_ref[...]
    o_ref[0] = sigmoid(out2).astype(o_ref.dtype)                     # dropout = identity


# ----------------------------------------------------------------------------
# Wrapper: batched graphs sharing one edge_index, batch axis = parallel grid
# ----------------------------------------------------------------------------
def gat_model_forward(x, edge_index, params, *, negative_slope=0.2,
                      mm_dtype=jnp.bfloat16):
    """x: (N, in) or (B, N, in); edge_index: (2, E) int32."""
    squeeze = (x.ndim == 2)
    if squeeze:
        x = x[None]
    b, n, in_ch = x.shape

    heads = params["w1c"].shape[0]
    hidden = params["w1c"].shape[2] - 1
    out_ch = params["w2c"].shape[2] - 1
    assert params["w1c"].shape[1] == in_ch

    mask_bias = build_mask_bias(edge_index, n)    # (N, N) bf16 additive bias

    kernel = functools.partial(_fused_gat2_kernel, heads=heads, hidden=hidden,
                               out_ch=out_ch, slope=float(negative_slope),
                               mm_dtype=mm_dtype)

    def fixed(shape):                             # same block every grid step
        return pl.BlockSpec(tuple(shape), lambda bb, _r=len(shape): (0,) * _r)

    in_specs = [
        pl.BlockSpec((1, n, in_ch), lambda bb: (bb, 0, 0)),   # per-graph x tile
        fixed(mask_bias.shape),                               # shared mask bias
        fixed(params["w1c"].shape), fixed(params["ap1s"].shape),
        fixed(params["b1"].shape), fixed(params["w2c"].shape),
        fixed(params["ap2s"].shape), fixed(params["b2"].shape),
    ]

    out = pl.pallas_call(
        kernel,
        out_shape=jax.ShapeDtypeStruct((b, n, out_ch), jnp.float32),
        grid=(b,),
        in_specs=in_specs,
        out_specs=pl.BlockSpec((1, n, out_ch), lambda bb: (bb, 0, 0)),
        compiler_params=pltpu.CompilerParams(
            dimension_semantics=("parallel",),        # megacore on v7x, pipelined batch
            vmem_limit_bytes=48 * 1024 * 1024),       # explicit (fits v5e/v6e/v7x)
    )(x.astype(jnp.float32), mask_bias, params["w1c"], params["ap1s"], params["b1"],
      params["w2c"], params["ap2s"], params["b2"])

    return out[0] if squeeze else out


# ----------------------------------------------------------------------------
# Plain-JAX host glue
# ----------------------------------------------------------------------------
def build_mask_bias(edge_index, num_nodes, neg=-1e30):
    """Additive softmax bias: 0 where edge j->i exists (incl. self loop), -1e30 else."""
    src, dst = edge_index[0], edge_index[1]
    adj = jnp.zeros((num_nodes, num_nodes), jnp.float32).at[dst, src].set(1.0)
    # GATConv: remove_self_loops + add_self_loops -> every node attends to itself once.
    adj = jnp.maximum(adj, jnp.eye(num_nodes, dtype=jnp.float32))
    return jnp.where(adj > 0, 0.0, neg).astype(jnp.bfloat16)


def make_ring_edges(num_nodes, degree):
    """Deterministic duplicate-free directed graph: node i -> i+1..i+degree (mod N)."""
    src = jnp.repeat(jnp.arange(num_nodes, dtype=jnp.int32), degree)
    offs = jnp.tile(jnp.arange(1, degree + 1, dtype=jnp.int32), num_nodes)
    dst = (src + offs) % num_nodes
    return jnp.stack([src, dst], axis=0)          # (2, N*degree)


def init_gat_raw_params(key, in_ch, hidden, out_ch, heads):
    """Glorot weights / attention vectors, zero biases (PyTorch-layout equivalents)."""
    def glorot(k, shape, fan_in, fan_out):
        lim = math.sqrt(6.0 / (fan_in + fan_out))
        return jax.random.uniform(k, shape, jnp.float32, -lim, lim)

    ks = jax.random.split(key, 6)
    return {
        "W1": glorot(ks[0], (in_ch, heads * hidden), in_ch, heads * hidden),
        "att1_src": glorot(ks[1], (heads, hidden), hidden, 1),
        "att1_dst": glorot(ks[2], (heads, hidden), hidden, 1),
        "b1": jnp.zeros((heads * hidden,), jnp.float32),
        "W2": glorot(ks[3], (heads * hidden, out_ch), heads * hidden, out_ch),
        "att2_src": glorot(ks[4], (out_ch,), out_ch, 1),
        "att2_dst": glorot(ks[5], (out_ch,), out_ch, 1),
        "b2": jnp.zeros((out_ch,), jnp.float32),
    }


def pack_params(raw, *, heads, hidden, out_ch, mm_dtype=jnp.bfloat16):
    """Fold attention vectors through the weights and lay heads on the leading axis."""
    in_ch = raw["W1"].shape[0]

    W1h = raw["W1"].reshape(in_ch, heads, hidden).transpose(1, 0, 2)   # (H, in, hid)
    ap1_dst = jnp.einsum("hid,hd->hi", W1h, raw["att1_dst"])           # (H, in)
    w1c = jnp.concatenate([W1h, ap1_dst[:, :, None]], axis=-1)         # (H, in, hid+1)
    ap1s = jnp.einsum("hid,hd->hi", W1h, raw["att1_src"])              # (H, in)
    b1 = raw["b1"].reshape(heads, 1, hidden)

    W2h = raw["W2"].reshape(heads, hidden, out_ch)                     # (H, hid, out)
    ap2_dst = jnp.einsum("hdo,o->hd", W2h, raw["att2_dst"])            # (H, hid)
    w2c = jnp.concatenate([W2h, ap2_dst[:, :, None]], axis=-1)         # (H, hid, out+1)
    ap2s = jnp.einsum("hdo,o->hd", W2h, raw["att2_src"])[:, None, :]   # (H, 1, hid)
    b2 = raw["b2"].reshape(1, out_ch)

    return {"w1c": w1c.astype(mm_dtype), "ap1s": ap1s.astype(mm_dtype),
            "b1": b1.astype(jnp.float32),
            "w2c": w2c.astype(mm_dtype), "ap2s": ap2s.astype(mm_dtype),
            "b2": b2.astype(jnp.float32)}


if __name__ == "__main__":
    # Small, module-consistent shapes: B graphs (sharing one adjacency), N nodes each.
    B, N = 2, 16
    in_channels, hidden_channels, out_channels, heads = 16, 32, 16, 2

    key = jax.random.PRNGKey(0)
    kx, kp = jax.random.split(key)
    x = jax.random.normal(kx, (B, N, in_channels), jnp.float32)
    edge_index = make_ring_edges(N, degree=3)                          # (2, 48)
    raw = init_gat_raw_params(kp, in_channels, hidden_channels, out_channels, heads)
    params = pack_params(raw, heads=heads, hidden=hidden_channels, out_ch=out_channels)

    out = gat_model_forward(x, edge_index, params)
    out = jax.block_until_ready(out)

    assert out.shape == (B, N, out_channels)
    assert bool(jnp.all(jnp.isfinite(out)))
    assert bool(jnp.all((out >= -1e-6) & (out <= 1.0 + 1e-6)))         # sigmoid range
    print("KERNEL_OK")
</pallas_src>

<mosaic_0001>
module attributes {stable_mosaic.version = 11 : i64} {
  func.func @_fused_gat2_kernel(%arg0: i32, %arg1: memref<1x16x16xf32, #tpu.memory_space<vmem>>, %arg2: memref<16x16xbf16, #tpu.memory_space<vmem>>, %arg3: memref<2x16x33xbf16, #tpu.memory_space<vmem>>, %arg4: memref<2x16xbf16, #tpu.memory_space<vmem>>, %arg5: memref<2x1x32xf32, #tpu.memory_space<vmem>>, %arg6: memref<2x32x17xbf16, #tpu.memory_space<vmem>>, %arg7: memref<2x1x32xbf16, #tpu.memory_space<vmem>>, %arg8: memref<1x16xf32, #tpu.memory_space<vmem>>, %arg9: memref<1x16x16xf32, #tpu.memory_space<vmem>>) attributes {dimension_semantics = [#tpu.dimension_semantics<parallel>], iteration_bounds = array<i64: 2>, scalar_prefetch = 0 : i64, scratch_operands = 0 : i64, tpu.core_type = #tpu.core_type<tc>, window_params = [{transform_indices = @transform_0, window_bounds = array<i64: 1, 16, 16>}, {pipeline_mode = #tpu.pipeline_mode<synchronous>, transform_indices = @transform_1, window_bounds = array<i64: 16, 16>}, {pipeline_mode = #tpu.pipeline_mode<synchronous>, transform_indices = @transform_2, window_bounds = array<i64: 2, 16, 33>}, {pipeline_mode = #tpu.pipeline_mode<synchronous>, transform_indices = @transform_3, window_bounds = array<i64: 2, 16>}, {pipeline_mode = #tpu.pipeline_mode<synchronous>, transform_indices = @transform_4, window_bounds = array<i64: 2, 1, 32>}, {pipeline_mode = #tpu.pipeline_mode<synchronous>, transform_indices = @transform_5, window_bounds = array<i64: 2, 32, 17>}, {pipeline_mode = #tpu.pipeline_mode<synchronous>, transform_indices = @transform_6, window_bounds = array<i64: 2, 1, 32>}, {pipeline_mode = #tpu.pipeline_mode<synchronous>, transform_indices = @transform_7, window_bounds = array<i64: 1, 16>}, {transform_indices = @transform_8, window_bounds = array<i64: 1, 16, 16>}]} {
    %c0 = arith.constant 0 : index
    %c0_0 = arith.constant 0 : index
    %c0_1 = arith.constant 0 : index
    %0 = vector.load %arg1[%c0, %c0_0, %c0_1] : memref<1x16x16xf32, #tpu.memory_space<vmem>>, vector<1x16x16xf32>
    %1 = vector.shape_cast %0 : vector<1x16x16xf32> to vector<16x16xf32>
    %2 = arith.truncf %1 : vector<16x16xf32> to vector<16x16xbf16>
    %c0_2 = arith.constant 0 : index
    %c0_3 = arith.constant 0 : index
    %3 = vector.load %arg2[%c0_2, %c0_3] : memref<16x16xbf16, #tpu.memory_space<vmem>>, vector<16x16xbf16>
    %4 = arith.extf %3 : vector<16x16xbf16> to vector<16x16xf32>
    %c0_4 = arith.constant 0 : index
    %c0_5 = arith.constant 0 : index
    %5 = vector.load %arg4[%c0_4, %c0_5] : memref<2x16xbf16, #tpu.memory_space<vmem>>, vector<2x16xbf16>
    %cst = arith.constant dense<0.000000e+00> : vector<2x16xf32>
    %6 = tpu.matmul %5, %2, %cst {dimension_numbers = #tpu.dot_dimension_numbers<[1], [1], [0], [0], [0, 0, 1, 0], [], []>} : vector<2x16xbf16>, vector<16x16xbf16>, vector<2x16xf32> -> vector<2x16xf32>
    %cst_6 = arith.constant 0.000000e+00 : f32
    %7 = vector.broadcast %cst_6 : f32 to vector<16x17xf32>
    %cst_7 = arith.constant 0.000000e+00 : f32
    %8 = vector.broadcast %cst_7 : f32 to vector<1x16xf32>
    %c0_8 = arith.constant 0 : index
    %c0_9 = arith.constant 0 : index
    %c0_10 = arith.constant 0 : index
    %9 = vector.load %arg3[%c0_8, %c0_9, %c0_10] : memref<2x16x33xbf16, #tpu.memory_space<vmem>>, vector<1x16x33xbf16>
    %10 = vector.shape_cast %9 : vector<1x16x33xbf16> to vector<16x33xbf16>
    %cst_11 = arith.constant dense<0.000000e+00> : vector<16x33xf32>
    %11 = tpu.matmul %2, %10, %cst_11 {dimension_numbers = #tpu.dot_dimension_numbers<[1], [0], [0], [1], [0, 0, 1, 1], [], []>} : vector<16x16xbf16>, vector<16x33xbf16>, vector<16x33xf32> -> vector<16x33xf32>
    %12 = vector.extract_strided_slice %11 {offsets = [0, 0], sizes = [16, 32], strides = [1, 1]} : vector<16x33xf32> to vector<16x32xf32>
    %13 = vector.extract_strided_slice %11 {offsets = [0, 32], sizes = [16, 1], strides = [1, 1]} : vector<16x33xf32> to vector<16x1xf32>
    %14 = vector.extract_strided_slice %6 {offsets = [0, 0], sizes = [1, 16], strides = [1, 1]} : vector<2x16xf32> to vector<1x16xf32>
    %15 = vector.broadcast %13 : vector<16x1xf32> to vector<16x16xf32>
    %16 = vector.broadcast %14 : vector<1x16xf32> to vector<16x16xf32>
    %17 = arith.addf %15, %16 : vector<16x16xf32>
    %cst_12 = arith.constant 0.000000e+00 : f32
    %18 = vector.broadcast %cst_12 : f32 to vector<16x16xf32>
    %19 = arith.cmpf oge, %17, %18 : vector<16x16xf32>
    %cst_13 = arith.constant 2.000000e-01 : f32
    %20 = vector.broadcast %cst_13 : f32 to vector<16x16xf32>
    %21 = arith.mulf %17, %20 : vector<16x16xf32>
    %22 = arith.select %19, %17, %21 : vector<16x16xi1>, vector<16x16xf32>
    %23 = arith.addf %22, %4 : vector<16x16xf32>
    %cst_14 = arith.constant dense<0xFF800000> : vector<16xf32>
    %24 = vector.multi_reduction <maximumf>, %23, %cst_14 [1] : vector<16x16xf32> to vector<16xf32>
    %25 = vector.shape_cast %24 : vector<16xf32> to vector<16x1xf32>
    %26 = vector.broadcast %25 : vector<16x1xf32> to vector<16x16xf32>
    %27 = arith.subf %23, %26 : vector<16x16xf32>
    %28 = math.exp %27 : vector<16x16xf32>
    %cst_15 = arith.constant dense<0.000000e+00> : vector<16xf32>
    %29 = vector.multi_reduction <add>, %28, %cst_15 [1] : vector<16x16xf32> to vector<16xf32>
    %30 = vector.shape_cast %29 : vector<16xf32> to vector<16x1xf32>
    %31 = tpu.reciprocal %30 {approx = true} : vector<16x1xf32> -> vector<16x1xf32>
    %32 = vector.broadcast %31 : vector<16x1xf32> to vector<16x16xf32>
    %33 = arith.mulf %28, %32 : vector<16x16xf32>
    %cst_16 = arith.constant dense<0.000000e+00> : vector<16x32xf32>
    %34 = tpu.matmul %33, %12, %cst_16 {dimension_numbers = #tpu.dot_dimension_numbers<[1], [0], [0], [1], [0, 0, 1, 1], [], []>} : vector<16x16xf32>, vector<16x32xf32>, vector<16x32xf32> -> vector<16x32xf32>
    %c0_17 = arith.constant 0 : index
    %c0_18 = arith.constant 0 : index
    %c0_19 = arith.constant 0 : index
    %35 = vector.load %arg5[%c0_17, %c0_18, %c0_19] : memref<2x1x32xf32, #tpu.memory_space<vmem>>, vector<1x1x32xf32>
    %36 = vector.shape_cast %35 : vector<1x1x32xf32> to vector<1x32xf32>
    %37 = vector.broadcast %36 : vector<1x32xf32> to vector<16x32xf32>
    %38 = arith.addf %34, %37 : vector<16x32xf32>
    %cst_20 = arith.constant 5.000000e-01 : f32
    %39 = vector.broadcast %cst_20 : f32 to vector<16x32xf32>
    %40 = arith.mulf %39, %38 : vector<16x32xf32>
    %41 = math.tanh %40 : vector<16x32xf32>
    %cst_21 = arith.constant 1.000000e+00 : f32
    %42 = vector.broadcast %cst_21 : f32 to vector<16x32xf32>
    %43 = arith.addf %41, %42 : vector<16x32xf32>
    %cst_22 = arith.constant 5.000000e-01 : f32
    %44 = vector.broadcast %cst_22 : f32 to vector<16x32xf32>
    %45 = arith.mulf %44, %43 : vector<16x32xf32>
    %46 = arith.truncf %45 : vector<16x32xf32> to vector<16x32xbf16>
    %c0_23 = arith.constant 0 : index
    %c0_24 = arith.constant 0 : index
    %c0_25 = arith.constant 0 : index
    %47 = vector.load %arg6[%c0_23, %c0_24, %c0_25] : memref<2x32x17xbf16, #tpu.memory_space<vmem>>, vector<1x32x17xbf16>
    %48 = vector.shape_cast %47 : vector<1x32x17xbf16> to vector<32x17xbf16>
    %cst_26 = arith.constant dense<0.000000e+00> : vector<16x17xf32>
    %49 = tpu.matmul %46, %48, %cst_26 {dimension_numbers = #tpu.dot_dimension_numbers<[1], [0], [0], [1], [0, 0, 1, 1], [], []>} : vector<16x32xbf16>, vector<32x17xbf16>, vector<16x17xf32> -> vector<16x17xf32>
    %50 = arith.addf %7, %49 : vector<16x17xf32>
    %c0_27 = arith.constant 0 : index
    %c0_28 = arith.constant 0 : index
    %c0_29 = arith.constant 0 : index
    %51 = vector.load %arg7[%c0_27, %c0_28, %c0_29] : memref<2x1x32xbf16, #tpu.memory_space<vmem>>, vector<1x1x32xbf16>
    %52 = vector.shape_cast %51 : vector<1x1x32xbf16> to vector<1x32xbf16>
    %cst_30 = arith.constant dense<0.000000e+00> : vector<1x16xf32>
    %53 = tpu.matmul %52, %46, %cst_30 {dimension_numbers = #tpu.dot_dimension_numbers<[1], [1], [0], [0], [0, 0, 1, 0], [], []>} : vector<1x32xbf16>, vector<16x32xbf16>, vector<1x16xf32> -> vector<1x16xf32>
    %54 = arith.addf %8, %53 : vector<1x16xf32>
    %c1 = arith.constant 1 : index
    %c0_31 = arith.constant 0 : index
    %c0_32 = arith.constant 0 : index
    %55 = vector.load %arg3[%c1, %c0_31, %c0_32] : memref<2x16x33xbf16, #tpu.memory_space<vmem>>, vector<1x16x33xbf16>
    %56 = vector.shape_cast %55 : vector<1x16x33xbf16> to vector<16x33xbf16>
    %cst_33 = arith.constant dense<0.000000e+00> : vector<16x33xf32>
    %57 = tpu.matmul %2, %56, %cst_33 {dimension_numbers = #tpu.dot_dimension_numbers<[1], [0], [0], [1], [0, 0, 1, 1], [], []>} : vector<16x16xbf16>, vector<16x33xbf16>, vector<16x33xf32> -> vector<16x33xf32>
    %58 = vector.extract_strided_slice %57 {offsets = [0, 0], sizes = [16, 32], strides = [1, 1]} : vector<16x33xf32> to vector<16x32xf32>
    %59 = vector.extract_strided_slice %57 {offsets = [0, 32], sizes = [16, 1], strides = [1, 1]} : vector<16x33xf32> to vector<16x1xf32>
    %60 = vector.extract_strided_slice %6 {offsets = [1, 0], sizes = [1, 16], strides = [1, 1]} : vector<2x16xf32> to vector<1x16xf32>
    %61 = vector.broadcast %59 : vector<16x1xf32> to vector<16x16xf32>
    %62 = vector.broadcast %60 : vector<1x16xf32> to vector<16x16xf32>
    %63 = arith.addf %61, %62 : vector<16x16xf32>
    %cst_34 = arith.constant 0.000000e+00 : f32
    %64 = vector.broadcast %cst_34 : f32 to vector<16x16xf32>
    %65 = arith.cmpf oge, %63, %64 : vector<16x16xf32>
    %cst_35 = arith.constant 2.000000e-01 : f32
    %66 = vector.broadcast %cst_35 : f32 to vector<16x16xf32>
    %67 = arith.mulf %63, %66 : vector<16x16xf32>
    %68 = arith.select %65, %63, %67 : vector<16x16xi1>, vector<16x16xf32>
    %69 = arith.addf %68, %4 : vector<16x16xf32>
    %cst_36 = arith.constant dense<0xFF800000> : vector<16xf32>
    %70 = vector.multi_reduction <maximumf>, %69, %cst_36 [1] : vector<16x16xf32> to vector<16xf32>
    %71 = vector.shape_cast %70 : vector<16xf32> to vector<16x1xf32>
    %72 = vector.broadcast %71 : vector<16x1xf32> to vector<16x16xf32>
    %73 = arith.subf %69, %72 : vector<16x16xf32>
    %74 = math.exp %73 : vector<16x16xf32>
    %cst_37 = arith.constant dense<0.000000e+00> : vector<16xf32>
    %75 = vector.multi_reduction <add>, %74, %cst_37 [1] : vector<16x16xf32> to vector<16xf32>
    %76 = vector.shape_cast %75 : vector<16xf32> to vector<16x1xf32>
    %77 = tpu.reciprocal %76 {approx = true} : vector<16x1xf32> -> vector<16x1xf32>
    %78 = vector.broadcast %77 : vector<16x1xf32> to vector<16x16xf32>
    %79 = arith.mulf %74, %78 : vector<16x16xf32>
    %cst_38 = arith.constant dense<0.000000e+00> : vector<16x32xf32>
    %80 = tpu.matmul %79, %58, %cst_38 {dimension_numbers = #tpu.dot_dimension_numbers<[1], [0], [0], [1], [0, 0, 1, 1], [], []>} : vector<16x16xf32>, vector<16x32xf32>, vector<16x32xf32> -> vector<16x32xf32>
    %c1_39 = arith.constant 1 : index
    %c0_40 = arith.constant 0 : index
    %c0_41 = arith.constant 0 : index
    %81 = vector.load %arg5[%c1_39, %c0_40, %c0_41] : memref<2x1x32xf32, #tpu.memory_space<vmem>>, vector<1x1x32xf32>
    %82 = vector.shape_cast %81 : vector<1x1x32xf32> to vector<1x32xf32>
    %83 = vector.broadcast %82 : vector<1x32xf32> to vector<16x32xf32>
    %84 = arith.addf %80, %83 : vector<16x32xf32>
    %cst_42 = arith.constant 5.000000e-01 : f32
    %85 = vector.broadcast %cst_42 : f32 to vector<16x32xf32>
    %86 = arith.mulf %85, %84 : vector<16x32xf32>
    %87 = math.tanh %86 : vector<16x32xf32>
    %cst_43 = arith.constant 1.000000e+00 : f32
    %88 = vector.broadcast %cst_43 : f32 to vector<16x32xf32>
    %89 = arith.addf %87, %88 : vector<16x32xf32>
    %cst_44 = arith.constant 5.000000e-01 : f32
    %90 = vector.broadcast %cst_44 : f32 to vector<16x32xf32>
    %91 = arith.mulf %90, %89 : vector<16x32xf32>
    %92 = arith.truncf %91 : vector<16x32xf32> to vector<16x32xbf16>
    %c1_45 = arith.constant 1 : index
    %c0_46 = arith.constant 0 : index
    %c0_47 = arith.constant 0 : index
    %93 = vector.load %arg6[%c1_45, %c0_46, %c0_47] : memref<2x32x17xbf16, #tpu.memory_space<vmem>>, vector<1x32x17xbf16>
    %94 = vector.shape_cast %93 : vector<1x32x17xbf16> to vector<32x17xbf16>
    %cst_48 = arith.constant dense<0.000000e+00> : vector<16x17xf32>
    %95 = tpu.matmul %92, %94, %cst_48 {dimension_numbers = #tpu.dot_dimension_numbers<[1], [0], [0], [1], [0, 0, 1, 1], [], []>} : vector<16x32xbf16>, vector<32x17xbf16>, vector<16x17xf32> -> vector<16x17xf32>
    %96 = arith.addf %50, %95 : vector<16x17xf32>
    %c1_49 = arith.constant 1 : index
    %c0_50 = arith.constant 0 : index
    %c0_51 = arith.constant 0 : index
    %97 = vector.load %arg7[%c1_49, %c0_50, %c0_51] : memref<2x1x32xbf16, #tpu.memory_space<vmem>>, vector<1x1x32xbf16>
    %98 = vector.shape_cast %97 : vector<1x1x32xbf16> to vector<1x32xbf16>
    %cst_52 = arith.constant dense<0.000000e+00> : vector<1x16xf32>
    %99 = tpu.matmul %98, %92, %cst_52 {dimension_numbers = #tpu.dot_dimension_numbers<[1], [1], [0], [0], [0, 0, 1, 0], [], []>} : vector<1x32xbf16>, vector<16x32xbf16>, vector<1x16xf32> -> vector<1x16xf32>
    %100 = arith.addf %54, %99 : vector<1x16xf32>
    %101 = vector.extract_strided_slice %96 {offsets = [0, 16], sizes = [16, 1], strides = [1, 1]} : vector<16x17xf32> to vector<16x1xf32>
    %102 = vector.broadcast %101 : vector<16x1xf32> to vector<16x16xf32>
    %103 = vector.broadcast %100 : vector<1x16xf32> to vector<16x16xf32>
    %104 = arith.addf %102, %103 : vector<16x16xf32>
    %cst_53 = arith.constant 0.000000e+00 : f32
    %105 = vector.broadcast %cst_53 : f32 to vector<16x16xf32>
    %106 = arith.cmpf oge, %104, %105 : vector<16x16xf32>
    %cst_54 = arith.constant 2.000000e-01 : f32
    %107 = vector.broadcast %cst_54 : f32 to vector<16x16xf32>
    %108 = arith.mulf %104, %107 : vector<16x16xf32>
    %109 = arith.select %106, %104, %108 : vector<16x16xi1>, vector<16x16xf32>
    %110 = arith.addf %109, %4 : vector<16x16xf32>
    %cst_55 = arith.constant dense<0xFF800000> : vector<16xf32>
    %111 = vector.multi_reduction <maximumf>, %110, %cst_55 [1] : vector<16x16xf32> to vector<16xf32>
    %112 = vector.shape_cast %111 : vector<16xf32> to vector<16x1xf32>
    %113 = vector.broadcast %112 : vector<16x1xf32> to vector<16x16xf32>
    %114 = arith.subf %110, %113 : vector<16x16xf32>
    %115 = math.exp %114 : vector<16x16xf32>
    %cst_56 = arith.constant dense<0.000000e+00> : vector<16xf32>
    %116 = vector.multi_reduction <add>, %115, %cst_56 [1] : vector<16x16xf32> to vector<16xf32>
    %117 = vector.shape_cast %116 : vector<16xf32> to vector<16x1xf32>
    %118 = tpu.reciprocal %117 {approx = true} : vector<16x1xf32> -> vector<16x1xf32>
    %119 = vector.broadcast %118 : vector<16x1xf32> to vector<16x16xf32>
    %120 = arith.mulf %115, %119 : vector<16x16xf32>
    %121 = vector.extract_strided_slice %96 {offsets = [0, 0], sizes = [16, 16], strides = [1, 1]} : vector<16x17xf32> to vector<16x16xf32>
    %cst_57 = arith.constant dense<0.000000e+00> : vector<16x16xf32>
    %122 = tpu.matmul %120, %121, %cst_57 {dimension_numbers = #tpu.dot_dimension_numbers<[1], [0], [0], [1], [0, 0, 1, 1], [], []>} : vector<16x16xf32>, vector<16x16xf32>, vector<16x16xf32> -> vector<16x16xf32>
    %c0_58 = arith.constant 0 : index
    %c0_59 = arith.constant 0 : index
    %123 = vector.load %arg8[%c0_58, %c0_59] : memref<1x16xf32, #tpu.memory_space<vmem>>, vector<1x16xf32>
    %124 = vector.broadcast %123 : vector<1x16xf32> to vector<16x16xf32>
    %125 = arith.addf %122, %124 : vector<16x16xf32>
    %cst_60 = arith.constant 5.000000e-01 : f32
    %126 = vector.broadcast %cst_60 : f32 to vector<16x16xf32>
    %127 = arith.mulf %126, %125 : vector<16x16xf32>
    %128 = math.tanh %127 : vector<16x16xf32>
    %cst_61 = arith.constant 1.000000e+00 : f32
    %129 = vector.broadcast %cst_61 : f32 to vector<16x16xf32>
    %130 = arith.addf %128, %129 : vector<16x16xf32>
    %cst_62 = arith.constant 5.000000e-01 : f32
    %131 = vector.broadcast %cst_62 : f32 to vector<16x16xf32>
    %132 = arith.mulf %131, %130 : vector<16x16xf32>
    %c0_63 = arith.constant 0 : index
    %c0_64 = arith.constant 0 : index
    %c0_65 = arith.constant 0 : index
    %133 = vector.load %arg9[%c0_63, %c0_64, %c0_65] : memref<1x16x16xf32, #tpu.memory_space<vmem>>, vector<1x16x16xf32>
    %134 = vector.shape_cast %133 : vector<1x16x16xf32> to vector<16x16xf32>
    %135 = vector.shape_cast %132 : vector<16x16xf32> to vector<1x16x16xf32>
    tpu.vector_store %arg9[%c0_63, %c0_64, %c0_65], %135 {strides = array<i32>} : memref<1x16x16xf32, #tpu.memory_space<vmem>>, vector<1x16x16xf32>,
    return
  }
  func.func @transform_0(%arg0: i32) -> (i32, i32, i32) {
    %c0_i32 = arith.constant 0 : i32
    %c0_i32_0 = arith.constant 0 : i32
    %c0_i32_1 = arith.constant 0 : i32
    return %arg0, %c0_i32, %c0_i32_0 : i32, i32, i32
  }
  func.func @transform_1(%arg0: i32) -> (i32, i32) {
    %c0_i32 = arith.constant 0 : i32
    %c0_i32_0 = arith.constant 0 : i32
    %c0_i32_1 = arith.constant 0 : i32
    return %c0_i32, %c0_i32_0 : i32, i32
  }
  func.func @transform_2(%arg0: i32) -> (i32, i32, i32) {
    %c0_i32 = arith.constant 0 : i32
    %c0_i32_0 = arith.constant 0 : i32
    %c0_i32_1 = arith.constant 0 : i32
    %c0_i32_2 = arith.constant 0 : i32
    return %c0_i32, %c0_i32_0, %c0_i32_1 : i32, i32, i32
  }
  func.func @transform_3(%arg0: i32) -> (i32, i32) {
    %c0_i32 = arith.constant 0 : i32
    %c0_i32_0 = arith.constant 0 : i32
    %c0_i32_1 = arith.constant 0 : i32
    return %c0_i32, %c0_i32_0 : i32, i32
  }
  func.func @transform_4(%arg0: i32) -> (i32, i32, i32) {
    %c0_i32 = arith.constant 0 : i32
    %c0_i32_0 = arith.constant 0 : i32
    %c0_i32_1 = arith.constant 0 : i32
    %c0_i32_2 = arith.constant 0 : i32
    return %c0_i32, %c0_i32_0, %c0_i32_1 : i32, i32, i32
  }
  func.func @transform_5(%arg0: i32) -> (i32, i32, i32) {
    %c0_i32 = arith.constant 0 : i32
    %c0_i32_0 = arith.constant 0 : i32
    %c0_i32_1 = arith.constant 0 : i32
    %c0_i32_2 = arith.constant 0 : i32
    return %c0_i32, %c0_i32_0, %c0_i32_1 : i32, i32, i32
  }
  func.func @transform_6(%arg0: i32) -> (i32, i32, i32) {
    %c0_i32 = arith.constant 0 : i32
    %c0_i32_0 = arith.constant 0 : i32
    %c0_i32_1 = arith.constant 0 : i32
    %c0_i32_2 = arith.constant 0 : i32
    return %c0_i32, %c0_i32_0, %c0_i32_1 : i32, i32, i32
  }
  func.func @transform_7(%arg0: i32) -> (i32, i32) {
    %c0_i32 = arith.constant 0 : i32
    %c0_i32_0 = arith.constant 0 : i32
    %c0_i32_1 = arith.constant 0 : i32
    return %c0_i32, %c0_i32_0 : i32, i32
  }
  func.func @transform_8(%arg0: i32) -> (i32, i32, i32) {
    %c0_i32 = arith.constant 0 : i32
    %c0_i32_0 = arith.constant 0 : i32
    %c0_i32_1 = arith.constant 0 : i32
    return %arg0, %c0_i32, %c0_i32_0 : i32, i32, i32
  }
}

</mosaic_0001>

<llo_original>
// kernel: tpu_custom_call.1
$region0: #{tpu_custom_call.1}
  #allocation0 [shape = 'u32[]', space=smem, size = 0x4, offset = 0x4, fixed_abs, tag = 'smem constant byte address 0x4 - core index']
  #allocation1 [shape = 'u32[144,128]{1,0:T(1,128)}', space=vmem, size = 0x12000, scoped, tag = 'internal scratch']
  %s0 = inlined_call_operand.vmem [shape: f32[2,16,16], index: 0, kind: input, shape index: {}]
  %s1 = inlined_call_operand.hbm [shape: bf16[16,16], index: 1, kind: input, shape index: {}]
  %s2 = inlined_call_operand.vmem [shape: bf16[2,16,33], index: 2, kind: input, shape index: {}]
  %s3 = inlined_call_operand.vmem [shape: bf16[2,16], index: 3, kind: input, shape index: {}]
  %s4 = inlined_call_operand.vmem [shape: f32[2,1,32], index: 4, kind: input, shape index: {}]
  %s5 = inlined_call_operand.vmem [shape: bf16[2,32,17], index: 5, kind: input, shape index: {}]
  %s6 = inlined_call_operand.vmem [shape: bf16[2,1,32], index: 6, kind: input, shape index: {}]
  %s7 = inlined_call_operand.vmem [shape: f32[1,16], index: 7, kind: input, shape index: {}]
  %s8 = inlined_call_operand.hbm [shape: f32[2,16,16], index: 8, kind: output, shape index: {}]
  %s9 = sld [smem:[#allocation0]]
  $region69: #{tpu_custom_call.1} parent=0
    _
  %s11 = ssub.s32 1, %s9
  %s12 = scalar_select 0, %s11, %s9
  $region1: #{tpu_custom_call.1} parent=0
    #allocation2 [shape = 'u8[4096]{0}', space=vmem, size = 0x1000, scoped, tag = 'input window, operand 1, single buffered']
    #allocation3 [shape = 's32[2]{0}', space=sflag, size = 0x8, scoped, tag = 'scoped memory for tpu_custom_call.1']
    #allocation4 [shape = 's32[2]{0}', space=sflag, size = 0x8, scoped, tag = 'scoped memory for tpu_custom_call.1']
    #allocation5 [shape = 'u8[16384]{0}', space=vmem, size = 0x4000, scoped, tag = 'output window, operand 0']
    %13 = vsyncpa [#allocation3], 0
    %14 = vsyncpa [#allocation4], 0
    %s15 = scalar_lea.sflag [#allocation4], 1
    %16 = vsyncpa %s15, 0
    loop: start=0, step=1, limit=4
    $region2: #{tpu_custom_call.1} parent=1 // loop_pre_header
      _
    $region3: #{tpu_custom_call.1} parent=1 // loop_header
      %s18 = sphi 0, %s22
      %p19 = scmp.ge.s32.totalorder %s18, 4
      %s28 = sphi 0, %s30
      %s31 = sphi 0, %s28
      %s32 = sphi 0, %s31
      %s48 = sphi 0, %s32
      %s52 = sphi 0, %s52
      %s54 = sphi 0, %s52
      %s55 = sphi 0, %s54
      %s69 = sphi 0, %s55
      %s73 = sphi 0, %s73
      %s75 = sphi 0, %s73
      %s76 = sphi 0, %s75
      %s90 = sphi 0, %s76
      %s94 = sphi 0, %s94
      %s96 = sphi 0, %s94
      %s97 = sphi 0, %s96
      %s111 = sphi 0, %s97
      %s115 = sphi 0, %s115
      %s117 = sphi 0, %s115
      %s118 = sphi 0, %s117
      %s132 = sphi 0, %s118
      %s136 = sphi 0, %s136
      %s138 = sphi 0, %s136
      %s139 = sphi 0, %s138
      %s153 = sphi 0, %s139
      %s157 = sphi 0, %s157
      %s159 = sphi 0, %s157
      %s160 = sphi 0, %s159
      %s174 = sphi 0, %s160
      %s178 = sphi 0, %s178
      %s180 = sphi 0, %s178
      %s181 = sphi 0, %s180
      %s195 = sphi 0, %s181
      %s201 = sphi 0, %s203
      %s204 = sphi 0, %s201
      %s205 = sphi 0, %s204
      %s221 = sphi 0, %s205
    $region4: #{tpu_custom_call.1} parent=1 // loop_header_branch
      %21 = sbr.rel (%p19) target = $region8
    $region5: #{tpu_custom_call.1} parent=1 // loop_body
      %s23 = ssub.s32 %s18, 1
      %s24 = ssub.s32 %s18, 2
      %s25 = sadd.s32 %s18, 1
      %s26 = ssub.s32 %s18, %s25
      %p27 = scmp.eq.s32.totalorder %s26, 0
      %s29 = sadd.s32 %s28, 1
      %s30 = scalar_select %p27, %s28, %s29
      %p33 = pneg %p27
      %p34 = scmp.eq.s32.totalorder %s18, 1
      %p35 = por %p33, %p34
      %p36 = scmp.ne.s32.totalorder %s28, %s31
      %p37 = scmp.eq.s32.totalorder %s18, 0
      %p38 = por %p36, %p37
      %p39 = scmp.ne.s32.totalorder %s28, %s31
      %p40 = scmp.eq.s32.totalorder %s23, 1
      %p41 = por %p39, %p40
      %p42 = scmp.ne.s32.totalorder %s31, %s32
      %p43 = scmp.eq.s32.totalorder %s23, 0
      %p44 = por %p42, %p43
      %p45 = scmp.ne.s32.totalorder %s31, %s32
      %p46 = scmp.eq.s32.totalorder %s24, 1
      %p47 = por %p45, %p46
      %p49 = scmp.ne.s32.totalorder %s32, %s48
      %p50 = scmp.eq.s32.totalorder %s24, 0
      %p51 = por %p49, %p50
      %s53 = sadd.s32 %s52, 1
      %p56 = scmp.eq.s32.totalorder %s18, 1
      %p57 = scmp.ne.s32.totalorder %s52, %s54
      %p58 = scmp.eq.s32.totalorder %s18, 0
      %p59 = por %p57, %p58
      %p60 = scmp.ne.s32.totalorder %s52, %s54
      %p61 = scmp.eq.s32.totalorder %s23, 1
      %p62 = por %p60, %p61
      %p63 = scmp.ne.s32.totalorder %s54, %s55
      %p64 = scmp.eq.s32.totalorder %s23, 0
      %p65 = por %p63, %p64
      %p66 = scmp.ne.s32.totalorder %s54, %s55
      %p67 = scmp.eq.s32.totalorder %s24, 1
      %p68 = por %p66, %p67
      %p70 = scmp.ne.s32.totalorder %s55, %s69
      %p71 = scmp.eq.s32.totalorder %s24, 0
      %p72 = por %p70, %p71
      %s74 = sadd.s32 %s73, 1
      %p77 = scmp.eq.s32.totalorder %s18, 1
      %p78 = scmp.ne.s32.totalorder %s73, %s75
      %p79 = scmp.eq.s32.totalorder %s18, 0
      %p80 = por %p78, %p79
      %p81 = scmp.ne.s32.totalorder %s73, %s75
      %p82 = scmp.eq.s32.totalorder %s23, 1
      %p83 = por %p81, %p82
      %p84 = scmp.ne.s32.totalorder %s75, %s76
      %p85 = scmp.eq.s32.totalorder %s23, 0
      %p86 = por %p84, %p85
      %p87 = scmp.ne.s32.totalorder %s75, %s76
      %p88 = scmp.eq.s32.totalorder %s24, 1
      %p89 = por %p87, %p88
      %p91 = scmp.ne.s32.totalorder %s76, %s90
      %p92 = scmp.eq.s32.totalorder %s24, 0
      %p93 = por %p91, %p92
      %s95 = sadd.s32 %s94, 1
      %p98 = scmp.eq.s32.totalorder %s18, 1
      %p99 = scmp.ne.s32.totalorder %s94, %s96
      %p100 = scmp.eq.s32.totalorder %s18, 0
      %p101 = por %p99, %p100
      %p102 = scmp.ne.s32.totalorder %s94, %s96
      %p103 = scmp.eq.s32.totalorder %s23, 1
      %p104 = por %p102, %p103
      %p105 = scmp.ne.s32.totalorder %s96, %s97
      %p106 = scmp.eq.s32.totalorder %s23, 0
      %p107 = por %p105, %p106
      %p108 = scmp.ne.s32.totalorder %s96, %s97
      %p109 = scmp.eq.s32.totalorder %s24, 1
      %p110 = por %p108, %p109
      %p112 = scmp.ne.s32.totalorder %s97, %s111
      %p113 = scmp.eq.s32.totalorder %s24, 0
      %p114 = por %p112, %p113
      %s116 = sadd.s32 %s115, 1
      %p119 = scmp.eq.s32.totalorder %s18, 1
      %p120 = scmp.ne.s32.totalorder %s115, %s117
      %p121 = scmp.eq.s32.totalorder %s18, 0
      %p122 = por %p120, %p121
      %p123 = scmp.ne.s32.totalorder %s115, %s117
      %p124 = scmp.eq.s32.totalorder %s23, 1
      %p125 = por %p123, %p124
      %p126 = scmp.ne.s32.totalorder %s117, %s118
      %p127 = scmp.eq.s32.totalorder %s23, 0
      %p128 = por %p126, %p127
      %p129 = scmp.ne.s32.totalorder %s117, %s118
      %p130 = scmp.eq.s32.totalorder %s24, 1
      %p131 = por %p129, %p130
      %p133 = scmp.ne.s32.totalorder %s118, %s132
      %p134 = scmp.eq.s32.totalorder %s24, 0
      %p135 = por %p133, %p134
      %s137 = sadd.s32 %s136, 1
      %p140 = scmp.eq.s32.totalorder %s18, 1
      %p141 = scmp.ne.s32.totalorder %s136, %s138
      %p142 = scmp.eq.s32.totalorder %s18, 0
      %p143 = por %p141, %p142
      %p144 = scmp.ne.s32.totalorder %s136, %s138
      %p145 = scmp.eq.s32.totalorder %s23, 1
      %p146 = por %p144, %p145
      %p147 = scmp.ne.s32.totalorder %s138, %s139
      %p148 = scmp.eq.s32.totalorder %s23, 0
      %p149 = por %p147, %p148
      %p150 = scmp.ne.s32.totalorder %s138, %s139
      %p151 = scmp.eq.s32.totalorder %s24, 1
      %p152 = por %p150, %p151
      %p154 = scmp.ne.s32.totalorder %s139, %s153
      %p155 = scmp.eq.s32.totalorder %s24, 0
      %p156 = por %p154, %p155
      %s158 = sadd.s32 %s157, 1
      %p161 = scmp.eq.s32.totalorder %s18, 1
      %p162 = scmp.ne.s32.totalorder %s157, %s159
      %p163 = scmp.eq.s32.totalorder %s18, 0
      %p164 = por %p162, %p163
      %p165 = scmp.ne.s32.totalorder %s157, %s159
      %p166 = scmp.eq.s32.totalorder %s23, 1
      %p167 = por %p165, %p166
      %p168 = scmp.ne.s32.totalorder %s159, %s160
      %p169 = scmp.eq.s32.totalorder %s23, 0
      %p170 = por %p168, %p169
      %p171 = scmp.ne.s32.totalorder %s159, %s160
      %p172 = scmp.eq.s32.totalorder %s24, 1
      %p173 = por %p171, %p172
      %p175 = scmp.ne.s32.totalorder %s160, %s174
      %p176 = scmp.eq.s32.totalorder %s24, 0
      %p177 = por %p175, %p176
      %s179 = sadd.s32 %s178, 1
      %p182 = scmp.eq.s32.totalorder %s18, 1
      %p183 = scmp.ne.s32.totalorder %s178, %s180
      %p184 = scmp.eq.s32.totalorder %s18, 0
      %p185 = por %p183, %p184
      %p186 = scmp.ne.s32.totalorder %s178, %s180
      %p187 = scmp.eq.s32.totalorder %s23, 1
      %p188 = por %p186, %p187
      %p189 = scmp.ne.s32.totalorder %s180, %s181
      %p190 = scmp.eq.s32.totalorder %s23, 0
      %p191 = por %p189, %p190
      %p192 = scmp.ne.s32.totalorder %s180, %s181
      %p193 = scmp.eq.s32.totalorder %s24, 1
      %p194 = por %p192, %p193
      %p196 = scmp.ne.s32.totalorder %s181, %s195
      %p197 = scmp.eq.s32.totalorder %s24, 0
      %p198 = por %p196, %p197
      %s199 = ssub.s32 %s18, %s25
      %p200 = scmp.eq.s32.totalorder %s199, 0
      %s202 = sadd.s32 %s201, 1
      %s203 = scalar_select %p200, %s201, %s202
      %p206 = pneg %p200
      %p207 = scmp.eq.s32.totalorder %s18, 1
      %p208 = por %p206, %p207
      %p209 = scmp.ne.s32.totalorder %s201, %s204
      %p210 = scmp.eq.s32.totalorder %s18, 0
      %p211 = por %p209, %p210
      %p212 = scmp.ne.s32.totalorder %s201, %s204
      %p213 = scmp.eq.s32.totalorder %s23, 1
      %p214 = por %p212, %p213
      %p215 = scmp.ne.s32.totalorder %s204, %s205
      %p216 = scmp.eq.s32.totalorder %s23, 0
      %p217 = por %p215, %p216
      %p218 = scmp.ne.s32.totalorder %s204, %s205
      %p219 = scmp.eq.s32.totalorder %s24, 1
      %p220 = por %p218, %p219
      %p222 = scmp.ne.s32.totalorder %s205, %s221
      %p223 = scmp.eq.s32.totalorder %s24, 0
      %p224 = por %p222, %p223
      %p225 = scmp.le.s32.totalorder 1, %s18
      %p226 = scmp.lt.s32.totalorder %s18, 3
      %p227 = pnand %p225, %p226
      %p228 = pneg %p227
      // Predicated region
      $region9: #{tpu_custom_call.1} parent=5 // pred_check
        _
      $region10: #{tpu_custom_call.1} parent=5 // pred_check_branch
        %230 = sbr.rel (%p227) target = $region12
      $region11: #{tpu_custom_call.1} parent=5 // pred_region
        %s231 = ssub.s32 %s18, 1
        // Predicated region
        $region13: #{tpu_custom_call.1} parent=11 // pred_check
          %p232 = pneg %p65
        $region14: #{tpu_custom_call.1} parent=11 // pred_check_branch
          %234 = sbr.rel (%p232) target = $region16
        $region15: #{tpu_custom_call.1} parent=11 // pred_region
          %s236 = ssub.s32 128, 128
          %237 = vsyncadd [#allocation3], %s236
          %s238 = sshll.u32 [#allocation2], 4
          %s239 = int_to_ptr.vmem [resolvable:$true] %s238
          %244 = dma.hbm_to_vmem [thread:$0]  %s1, 128, %s239, [#allocation3], 64, 64, 4
        $region16: #{tpu_custom_call.1} parent=11 // pred_fallthru
          _
        // Predicated region
        $region17: #{tpu_custom_call.1} parent=11 // pred_check
          %p245 = pneg %p86
        $region18: #{tpu_custom_call.1} parent=11 // pred_check_branch
          %247 = sbr.rel (%p245) target = $region20
        $region19: #{tpu_custom_call.1} parent=11 // pred_region
          _
        $region20: #{tpu_custom_call.1} parent=11 // pred_fallthru
          _
        // Predicated region
        $region21: #{tpu_custom_call.1} parent=11 // pred_check
          %p248 = pneg %p107
        $region22: #{tpu_custom_call.1} parent=11 // pred_check_branch
          %250 = sbr.rel (%p248) target = $region24
        $region23: #{tpu_custom_call.1} parent=11 // pred_region
          _
        $region24: #{tpu_custom_call.1} parent=11 // pred_fallthru
          _
        // Predicated region
        $region25: #{tpu_custom_call.1} parent=11 // pred_check
          %p251 = pneg %p128
        $region26: #{tpu_custom_call.1} parent=11 // pred_check_branch
          %253 = sbr.rel (%p251) target = $region28
        $region27: #{tpu_custom_call.1} parent=11 // pred_region
          _
        $region28: #{tpu_custom_call.1} parent=11 // pred_fallthru
          _
        // Predicated region
        $region29: #{tpu_custom_call.1} parent=11 // pred_check
          %p254 = pneg %p149
        $region30: #{tpu_custom_call.1} parent=11 // pred_check_branch
          %256 = sbr.rel (%p254) target = $region32
        $region31: #{tpu_custom_call.1} parent=11 // pred_region
          _
        $region32: #{tpu_custom_call.1} parent=11 // pred_fallthru
          _
        // Predicated region
        $region33: #{tpu_custom_call.1} parent=11 // pred_check
          %p257 = pneg %p170
        $region34: #{tpu_custom_call.1} parent=11 // pred_check_branch
          %259 = sbr.rel (%p257) target = $region36
        $region35: #{tpu_custom_call.1} parent=11 // pred_region
          _
        $region36: #{tpu_custom_call.1} parent=11 // pred_fallthru
          _
        // Predicated region
        $region37: #{tpu_custom_call.1} parent=11 // pred_check
          %p260 = pneg %p191
        $region38: #{tpu_custom_call.1} parent=11 // pred_check_branch
          %262 = sbr.rel (%p260) target = $region40
        $region39: #{tpu_custom_call.1} parent=11 // pred_region
          _
        $region40: #{tpu_custom_call.1} parent=11 // pred_fallthru
          _
      $region12: #{tpu_custom_call.1} parent=5 // pred_fallthru
        _
      %p263 = scmp.lt.s32.totalorder %s18, 2
      // Predicated region
      $region41: #{tpu_custom_call.1} parent=5 // pred_check
        %p264 = pneg %p263
      $region42: #{tpu_custom_call.1} parent=5 // pred_check_branch
        %266 = sbr.rel (%p264) target = $region44
      $region43: #{tpu_custom_call.1} parent=5 // pred_region
        // Predicated region
        $region45: #{tpu_custom_call.1} parent=43 // pred_check
          %p267 = pneg %p38
        $region46: #{tpu_custom_call.1} parent=43 // pred_check_branch
          %269 = sbr.rel (%p267) target = $region48
        $region47: #{tpu_custom_call.1} parent=43 // pred_region
          %p270 = scmp.lt.s32.totalorder %s18, 1
          %s271 = scalar_select %p270, %s18, 1
          %s272 = smul.addr %s271, 2
          %s273 = smul.addr %s272, 8
          %s274 = scalar_lea.vmem %s0, %s273
        $region48: #{tpu_custom_call.1} parent=43 // pred_fallthru
          _
      $region44: #{tpu_custom_call.1} parent=5 // pred_fallthru
        _
      %p275 = scmp.le.s32.totalorder 1, %s18
      %p276 = scmp.lt.s32.totalorder %s18, 3
      %p277 = pnand %p275, %p276
      %p278 = pneg %p277
      // Predicated region
      $region49: #{tpu_custom_call.1} parent=5 // pred_check
        _
      $region50: #{tpu_custom_call.1} parent=5 // pred_check_branch
        %280 = sbr.rel (%p277) target = $region52
      $region51: #{tpu_custom_call.1} parent=5 // pred_region
        %s281 = ssub.s32 %s18, 1
        // Predicated region
        $region53: #{tpu_custom_call.1} parent=51 // pred_check
          %p282 = pneg %p65
        $region54: #{tpu_custom_call.1} parent=51 // pred_check_branch
          %284 = sbr.rel (%p282) target = $region56
        $region55: #{tpu_custom_call.1} parent=51 // pred_region
          %285 = dma.done [#allocation3], 128
        $region56: #{tpu_custom_call.1} parent=51 // pred_fallthru
          _
        %p286 = scmp.lt.s32.totalorder %s23, 1
        %s287 = scalar_select %p286, %s23, 1
        %s288 = smul.addr %s287, 2
        %s289 = smul.addr %s288, 8
        %s290 = scalar_lea.vmem %s0, %s289
        %p291 = pneg %p44
        %p292 = pneg %p41
        %p293 = pneg %p65
        %p294 = pneg %p62
        %p295 = pneg %p86
        %p296 = pneg %p83
        %p297 = pneg %p107
        %p298 = pneg %p104
        %p299 = pneg %p128
        %p300 = pneg %p125
        %p301 = pneg %p149
        %p302 = pneg %p146
        %p303 = pneg %p170
        %p304 = pneg %p167
        %p305 = pneg %p191
        %p306 = pneg %p188
        %p307 = pneg %p217
        %p308 = pneg %p214
        %s309 = sand.u32 %s204, 1
        %s310 = scalar_lea.sflag [#allocation4], %s309
        %s311 = sand.u32 %s204, 1
        %s312 = smul.addr %s311, 16
        %s313 = scalar_lea.vmem [#allocation5], %s312
        %p314 = scmp.lt.s32.totalorder %s23, 1
        %s315 = scalar_select %p314, %s23, 1
        %s316 = smul.addr %s315, 2
        %s317 = smul.addr %s316, 8
        %s318 = scalar_lea.vmem %s0, %s317
        %v320 = vld [vmem:[%s318] sm:$0xff]
        %v321 = vld [vmem:[%s318 + $0x8] sm:$0xff]
        %v322 = vpack.c.bf16 %v321, %v320
        %v323 = vld [vmem:[#allocation2] sm:$0xf]
        %v324 = vld [vmem:[#allocation2 + $0x4] sm:$0xf]
        %v325 = vunpack.c.l.bf16 %v323
        %v326 = vunpack.c.l.bf16 %v324
        %v327 = vld [vmem:[%s3] sm:$0x1]
        %vm328 = vcmask 130048
        %v330 = vsel %vm328, %v327, 0
        %v333 = vsel %vm328, %v322, 0
        %335 = vmatprep.subr.bf16.mxu0 0
        %336 = vmatpush1.bf16.xpose.msra.mxu0 %v333
        %337 = vmatprep.subr.bf16.mxu0 0
        %338 = vmatpush1.bf16.xpose.msra.mxu0 0
        %339 = vmatprep.subr.bf16.mxu0 0
        %340 = vmatpush1.bf16.xpose.msra.mxu0 0
        %341 = vmatprep.subr.bf16.mxu0 0
        %342 = vmatpush1.bf16.xpose.msra.mxu0 0
        %343 = vmatprep.subr.bf16.mxu0 0
        %344 = vmatpush1.bf16.xpose.msra.mxu0 0
        %345 = vmatprep.subr.bf16.mxu0 0
        %346 = vmatpush1.bf16.xpose.msra.mxu0 0
        %347 = vmatprep.subr.bf16.mxu0 0
        %348 = vmatpush1.bf16.xpose.msra.mxu0 0
        %349 = vmatprep.subr.bf16.mxu0 0
        %350 = vmatpush1.bf16.xpose.msra.mxu0 0
        %351 = vmatprep.subr.bf16.mxu0 0
        %352 = vmatpush1.bf16.xpose.msra.mxu0 0
        %353 = vmatprep.subr.bf16.mxu0 0
        %354 = vmatpush1.bf16.xpose.msra.mxu0 0
        %355 = vmatprep.subr.bf16.mxu0 0
        %356 = vmatpush1.bf16.xpose.msra.mxu0 0
        %357 = vmatprep.subr.bf16.mxu0 0
        %358 = vmatpush1.bf16.xpose.msra.mxu0 0
        %359 = vmatprep.subr.bf16.mxu0 0
        %360 = vmatpush1.bf16.xpose.msra.mxu0 0
        %361 = vmatprep.subr.bf16.mxu0 0
        %362 = vmatpush1.bf16.xpose.msra.mxu0 0
        %363 = vmatprep.subr.bf16.mxu0 0
        %364 = vmatpush1.bf16.xpose.msra.mxu0 0
        %365 = vmatprep.subr.bf16.mxu0 0
        %366 = vmatpush1.bf16.xpose.msra.mxu0 0
        %367 = vmatprep.mubr.bf16.mxu0 0
        %368 = vmatmul.mubr.bf16.gmra.mrb[0].mxu0 %v330
        %v369 = vpop.f32.mrb[0].mxu0
        %v370 = vadd.f32 0.0, %v369
        %v371 = vpop.f32.mrb[0].mxu0
        %v372 = vpop.f32.mrb[0].mxu0
        %v373 = vpop.f32.mrb[0].mxu0
        %374 = vdwg.mxu0
        %v375 = vld [vmem:[%s2] sm:$0xf]
        %v376 = vld [vmem:[%s2 + $0x4] sm:$0xf]
        %v379 = vunpack.c.l.b16 %v375
        %v380 = vunpack.c.l.b16 %v376
        %v381 = vpack.c.b16 %v380, %v379
        %383 = vmatprep.subr.bf16.mxu0 0
        %384 = vmatpush1.bf16.msra.mxu0 %v381
        %385 = vmatprep.subr.bf16.mxu0 0
        %386 = vmatpush1.bf16.msra.mxu0 0
        %387 = vmatprep.subr.bf16.mxu0 0
        %388 = vmatpush1.bf16.msra.mxu0 0
        %389 = vmatprep.subr.bf16.mxu0 0
        %390 = vmatpush1.bf16.msra.mxu0 0
        %391 = vmatprep.subr.bf16.mxu0 0
        %392 = vmatpush1.bf16.msra.mxu0 0
        %393 = vmatprep.subr.bf16.mxu0 0
        %394 = vmatpush1.bf16.msra.mxu0 0
        %395 = vmatprep.subr.bf16.mxu0 0
        %396 = vmatpush1.bf16.msra.mxu0 0
        %397 = vmatprep.subr.bf16.mxu0 0
        %398 = vmatpush1.bf16.msra.mxu0 0
        %399 = vmatprep.subr.bf16.mxu0 0
        %400 = vmatpush1.bf16.msra.mxu0 0
        %401 = vmatprep.subr.bf16.mxu0 0
        %402 = vmatpush1.bf16.msra.mxu0 0
        %403 = vmatprep.subr.bf16.mxu0 0
        %404 = vmatpush1.bf16.msra.mxu0 0
        %405 = vmatprep.subr.bf16.mxu0 0
        %406 = vmatpush1.bf16.msra.mxu0 0
        %407 = vmatprep.subr.bf16.mxu0 0
        %408 = vmatpush1.bf16.msra.mxu0 0
        %409 = vmatprep.subr.bf16.mxu0 0
        %410 = vmatpush1.bf16.msra.mxu0 0
        %411 = vmatprep.subr.bf16.mxu0 0
        %412 = vmatpush1.bf16.msra.mxu0 0
        %413 = vmatprep.subr.bf16.mxu0 0
        %414 = vmatpush1.bf16.msra.mxu0 0
        %415 = vmatprep.mubr.bf16.mxu0 0
        %416 = vmatmul.mubr.bf16.gmra.mrb[0].mxu0 %v333
        %v417 = vpop.f32.mrb[0].mxu0
        %v418 = vadd.f32 0.0, %v417
        %v419 = vpop.f32.mrb[0].mxu0
        %v420 = vpop.f32.mrb[0].mxu0
        %v421 = vadd.f32 0.0, %v420
        %v422 = vpop.f32.mrb[0].mxu0
        %423 = vdwg.mxu0
        %425 = vset.pattern.permute.xlu0 32
        %426 = vperm.xlu0 %425, %v418
        %v427 = vpop.permute.xlu0 %426
        %430 = vset.pattern.permute.xlu0 32
        %431 = vperm.xlu0 %430, %v421
        %v432 = vpop.permute.xlu0 %431
        %v434 = vlaneseq
        %v435 = vshrl.u32 %v434, 7
        %v436 = vsub.s32 0, %v435
        %v437 = vrot.slane %v370, %v436
        %v438 = vadd.f32 %v427, %v437
        %v439 = vadd.f32 %v432, %v437
        %vm440 = vcmp.ge.f32.partialorder %v438, 0.0
        %vm441 = vcmp.ge.f32.partialorder %v439, 0.0
        %v442 = vmul.f32 %v438, 0.2
        %v443 = vmul.f32 %v439, 0.2
        %v444 = vsel %vm440, %v438, %v442
        %v445 = vsel %vm441, %v439, %v443
        %v446 = vadd.f32 %v444, %v325
        %v447 = vadd.f32 %v445, %v326
        %v448 = vsel %vm328, %v446, -inf
        %449 = vmax.xlane.f32.xlu0 %v448
        %v450 = vpop.xlane.xlu0 %449
        %v451 = vsel %vm328, %v447, -inf
        %452 = vmax.xlane.f32.xlu0 %v451
        %v453 = vpop.xlane.xlu0 %452
        %v454 = vsub.f32 %v446, %v450
        %v455 = vsub.f32 %v447, %v453
        %v456 = vmul.f32 %v454, 1.442695
        %v457 = vpow.pop %v456
        %v458 = vmul.f32 %v455, 1.442695
        %v459 = vpow.pop %v458
        %v460 = vsel %vm328, %v457, 0.0
        %461 = vadd.xlane.f32.xlu0 %v460
        %v462 = vpop.xlane.xlu0 %461
        %v463 = vsel %vm328, %v459, 0.0
        %464 = vadd.xlane.f32.xlu0 %v463
        %v465 = vpop.xlane.xlu0 %464
        %v466 = vrcp.pop %v462
        %v467 = vrcp.pop %v465
        %v468 = vmul.f32 %v457, %v466
        %v469 = vmul.f32 %v459, %v467
        %v470 = vld [vmem:[%s4] sm:$0x1]
        %v472 = vlaneseq
        %v473 = vshrl.u32 %v472, 7
        %v474 = vsub.s32 0, %v473
        %v475 = vrot.slane %v470, %v474
        %v478 = vsel %vm328, %v468, 0
        %v481 = vsel %vm328, %v469, 0
        %483 = vmatprep.subr.mxu0 0.0
        %484 = vmatpush1.msra.mxu0 %v418
        %485 = vmatprep.subr.mxu0 0.0
        %486 = vmatpush1.msra.mxu0 %v421
        %487 = vmatprep.subr.mxu0 0.0
        %488 = vmatpush1.msra.mxu0 0.0
        %489 = vmatprep.subr.mxu0 0.0
        %490 = vmatpush1.msra.mxu0 0.0
        %491 = vmatprep.subr.mxu0 0.0
        %492 = vmatpush1.msra.mxu0 0.0
        %493 = vmatprep.subr.mxu0 0.0
        %494 = vmatpush1.msra.mxu0 0.0
        %495 = vmatprep.subr.mxu0 0.0
        %496 = vmatpush1.msra.mxu0 0.0
        %497 = vmatprep.subr.mxu0 0.0
        %498 = vmatpush1.msra.mxu0 0.0
        %499 = vmatprep.subr.mxu0 0.0
        %500 = vmatpush1.msra.mxu0 0.0
        %501 = vmatprep.subr.mxu0 0.0
        %502 = vmatpush1.msra.mxu0 0.0
        %503 = vmatprep.subr.mxu0 0.0
        %504 = vmatpush1.msra.mxu0 0.0
        %505 = vmatprep.subr.mxu0 0.0
        %506 = vmatpush1.msra.mxu0 0.0
        %507 = vmatprep.subr.mxu0 0.0
        %508 = vmatpush1.msra.mxu0 0.0
        %509 = vmatprep.subr.mxu0 0.0
        %510 = vmatpush1.msra.mxu0 0.0
        %511 = vmatprep.subr.mxu0 0.0
        %512 = vmatpush1.msra.mxu0 0.0
        %513 = vmatprep.subr.mxu0 0.0
        %514 = vmatpush1.msra.mxu0 0.0
        %515 = vmatprep.subr.mxu0 0.0
        %516 = vmatpush1.msra.mxu0 0.0
        %517 = vmatprep.subr.mxu0 0.0
        %518 = vmatpush1.msra.mxu0 0.0
        %519 = vmatprep.subr.mxu0 0.0
        %520 = vmatpush1.msra.mxu0 0.0
        %521 = vmatprep.subr.mxu0 0.0
        %522 = vmatpush1.msra.mxu0 0.0
        %523 = vmatprep.subr.mxu0 0.0
        %524 = vmatpush1.msra.mxu0 0.0
        %525 = vmatprep.subr.mxu0 0.0
        %526 = vmatpush1.msra.mxu0 0.0
        %527 = vmatprep.subr.mxu0 0.0
        %528 = vmatpush1.msra.mxu0 0.0
        %529 = vmatprep.subr.mxu0 0.0
        %530 = vmatpush1.msra.mxu0 0.0
        %531 = vmatprep.subr.mxu0 0.0
        %532 = vmatpush1.msra.mxu0 0.0
        %533 = vmatprep.subr.mxu0 0.0
        %534 = vmatpush1.msra.mxu0 0.0
        %535 = vmatprep.subr.mxu0 0.0
        %536 = vmatpush1.msra.mxu0 0.0
        %537 = vmatprep.subr.mxu0 0.0
        %538 = vmatpush1.msra.mxu0 0.0
        %539 = vmatprep.subr.mxu0 0.0
        %540 = vmatpush1.msra.mxu0 0.0
        %541 = vmatprep.subr.mxu0 0.0
        %542 = vmatpush1.msra.mxu0 0.0
        %543 = vmatprep.subr.mxu0 0.0
        %544 = vmatpush1.msra.mxu0 0.0
        %545 = vmatprep.subr.mxu0 0.0
        %546 = vmatpush1.msra.mxu0 0.0
        %547 = vmatprep.mubr.f32.mxu0 0.0
        %548 = vmatmul.mubr.f32.gmra.mrb[0].mxu0 %v478
        %v549 = vpop.f32.mrb[0].mxu0
        %v550 = vadd.f32 %v475, %v549
        %v551 = vpop.f32.mrb[0].mxu0
        %552 = vmatprep.mubr.f32.mxu0 0.0
        %553 = vmatmul.mubr.f32.gmra.mrb[0].mxu0 %v481
        %v554 = vpop.f32.mrb[0].mxu0
        %v555 = vadd.f32 %v475, %v554
        %v556 = vpop.f32.mrb[0].mxu0
        %557 = vdwg.mxu0
        %v558 = vmul.f32 %v550, 0.5
        %v559 = vmul.f32 %v555, 0.5
        %v560 = vtanh.pop %v558
        %v561 = vtanh.pop %v559
        %v562 = vadd.f32 %v560, 1.0
        %v563 = vadd.f32 %v561, 1.0
        %v564 = vmul.f32 %v562, 0.5
        %v565 = vmul.f32 %v563, 0.5
        %v566 = vpack.c.bf16 %v565, %v564
        %v567 = vld [vmem:[%s5] sm:$0xf]
        %v568 = vld [vmem:[%s5 + $0x4] sm:$0xf]
        %v569 = vld [vmem:[%s5 + $0x8] sm:$0xf]
        %v570 = vld [vmem:[%s5 + $0xc] sm:$0xf]
        %v571 = vld [vmem:[%s6] sm:$0x1]
        %s572 = scalar_lea.vmem %s2, 8
        %v573 = vld [vmem:[%s572] sm:$0xf]
        %v574 = vld [vmem:[%s572 + $0x4] sm:$0xf]
        %v577 = vunpack.c.l.b16 %v573
        %v578 = vunpack.c.l.b16 %v574
        %v579 = vpack.c.b16 %v578, %v577
        %581 = vmatprep.subr.bf16.mxu0 0
        %582 = vmatpush1.bf16.msra.mxu0 %v579
        %583 = vmatprep.subr.bf16.mxu0 0
        %584 = vmatpush1.bf16.msra.mxu0 0
        %585 = vmatprep.subr.bf16.mxu0 0
        %586 = vmatpush1.bf16.msra.mxu0 0
        %587 = vmatprep.subr.bf16.mxu0 0
        %588 = vmatpush1.bf16.msra.mxu0 0
        %589 = vmatprep.subr.bf16.mxu0 0
        %590 = vmatpush1.bf16.msra.mxu0 0
        %591 = vmatprep.subr.bf16.mxu0 0
        %592 = vmatpush1.bf16.msra.mxu0 0
        %593 = vmatprep.subr.bf16.mxu0 0
        %594 = vmatpush1.bf16.msra.mxu0 0
        %595 = vmatprep.subr.bf16.mxu0 0
        %596 = vmatpush1.bf16.msra.mxu0 0
        %597 = vmatprep.subr.bf16.mxu0 0
        %598 = vmatpush1.bf16.msra.mxu0 0
        %599 = vmatprep.subr.bf16.mxu0 0
        %600 = vmatpush1.bf16.msra.mxu0 0
        %601 = vmatprep.subr.bf16.mxu0 0
        %602 = vmatpush1.bf16.msra.mxu0 0
        %603 = vmatprep.subr.bf16.mxu0 0
        %604 = vmatpush1.bf16.msra.mxu0 0
        %605 = vmatprep.subr.bf16.mxu0 0
        %606 = vmatpush1.bf16.msra.mxu0 0
        %607 = vmatprep.subr.bf16.mxu0 0
        %608 = vmatpush1.bf16.msra.mxu0 0
        %609 = vmatprep.subr.bf16.mxu0 0
        %610 = vmatpush1.bf16.msra.mxu0 0
        %611 = vmatprep.subr.bf16.mxu0 0
        %612 = vmatpush1.bf16.msra.mxu0 0
        %613 = vmatprep.mubr.bf16.mxu0 0
        %614 = vmatmul.mubr.bf16.gmra.mrb[0].mxu0 %v333
        %v615 = vpop.f32.mrb[0].mxu0
        %v616 = vadd.f32 0.0, %v615
        %v617 = vpop.f32.mrb[0].mxu0
        %v618 = vpop.f32.mrb[0].mxu0
        %v619 = vadd.f32 0.0, %v618
        %v620 = vpop.f32.mrb[0].mxu0
        %621 = vdwg.mxu0
        %623 = vset.pattern.permute.xlu0 32
        %624 = vperm.xlu0 %623, %v616
        %v625 = vpop.permute.xlu0 %624
        %628 = vset.pattern.permute.xlu0 32
        %629 = vperm.xlu0 %628, %v619
        %v630 = vpop.permute.xlu0 %629
        %v632 = vlaneseq
        %v633 = vshrl.u32 %v632, 7
        %v634 = vsub.s32 1, %v633
        %v635 = vrot.slane %v370, %v634
        %v636 = vadd.f32 %v625, %v635
        %v637 = vadd.f32 %v630, %v635
        %vm638 = vcmp.ge.f32.partialorder %v636, 0.0
        %vm639 = vcmp.ge.f32.partialorder %v637, 0.0
        %v640 = vmul.f32 %v636, 0.2
        %v641 = vmul.f32 %v637, 0.2
        %v642 = vsel %vm638, %v636, %v640
        %v643 = vsel %vm639, %v637, %v641
        %v644 = vadd.f32 %v642, %v325
        %v645 = vadd.f32 %v643, %v326
        %v646 = vsel %vm328, %v644, -inf
        %647 = vmax.xlane.f32.xlu0 %v646
        %v648 = vpop.xlane.xlu0 %647
        %v649 = vsel %vm328, %v645, -inf
        %650 = vmax.xlane.f32.xlu0 %v649
        %v651 = vpop.xlane.xlu0 %650
        %v652 = vsub.f32 %v644, %v648
        %v653 = vsub.f32 %v645, %v651
        %v654 = vmul.f32 %v652, 1.442695
        %v655 = vpow.pop %v654
        %v656 = vmul.f32 %v653, 1.442695
        %v657 = vpow.pop %v656
        %v658 = vsel %vm328, %v655, 0.0
        %659 = vadd.xlane.f32.xlu0 %v658
        %v660 = vpop.xlane.xlu0 %659
        %v661 = vsel %vm328, %v657, 0.0
        %662 = vadd.xlane.f32.xlu0 %v661
        %v663 = vpop.xlane.xlu0 %662
        %v664 = vrcp.pop %v660
        %v665 = vrcp.pop %v663
        %v666 = vmul.f32 %v655, %v664
        %v667 = vmul.f32 %v657, %v665
        %s668 = scalar_lea.vmem %s4, 1
        %v669 = vld [vmem:[%s668] sm:$0x1]
        %v671 = vlaneseq
        %v672 = vshrl.u32 %v671, 7
        %v673 = vsub.s32 0, %v672
        %v674 = vrot.slane %v669, %v673
        %v677 = vsel %vm328, %v666, 0
        %v680 = vsel %vm328, %v667, 0
        %682 = vmatprep.subr.mxu0 0.0
        %683 = vmatpush1.msra.mxu0 %v616
        %684 = vmatprep.subr.mxu0 0.0
        %685 = vmatpush1.msra.mxu0 %v619
        %686 = vmatprep.subr.mxu0 0.0
        %687 = vmatpush1.msra.mxu0 0.0
        %688 = vmatprep.subr.mxu0 0.0
        %689 = vmatpush1.msra.mxu0 0.0
        %690 = vmatprep.subr.mxu0 0.0
        %691 = vmatpush1.msra.mxu0 0.0
        %692 = vmatprep.subr.mxu0 0.0
        %693 = vmatpush1.msra.mxu0 0.0
        %694 = vmatprep.subr.mxu0 0.0
        %695 = vmatpush1.msra.mxu0 0.0
        %696 = vmatprep.subr.mxu0 0.0
        %697 = vmatpush1.msra.mxu0 0.0
        %698 = vmatprep.subr.mxu0 0.0
        %699 = vmatpush1.msra.mxu0 0.0
        %700 = vmatprep.subr.mxu0 0.0
        %701 = vmatpush1.msra.mxu0 0.0
        %702 = vmatprep.subr.mxu0 0.0
        %703 = vmatpush1.msra.mxu0 0.0
        %704 = vmatprep.subr.mxu0 0.0
        %705 = vmatpush1.msra.mxu0 0.0
        %706 = vmatprep.subr.mxu0 0.0
        %707 = vmatpush1.msra.mxu0 0.0
        %708 = vmatprep.subr.mxu0 0.0
        %709 = vmatpush1.msra.mxu0 0.0
        %710 = vmatprep.subr.mxu0 0.0
        %711 = vmatpush1.msra.mxu0 0.0
        %712 = vmatprep.subr.mxu0 0.0
        %713 = vmatpush1.msra.mxu0 0.0
        %714 = vmatprep.subr.mxu0 0.0
        %715 = vmatpush1.msra.mxu0 0.0
        %716 = vmatprep.subr.mxu0 0.0
        %717 = vmatpush1.msra.mxu0 0.0
        %718 = vmatprep.subr.mxu0 0.0
        %719 = vmatpush1.msra.mxu0 0.0
        %720 = vmatprep.subr.mxu0 0.0
        %721 = vmatpush1.msra.mxu0 0.0
        %722 = vmatprep.subr.mxu0 0.0
        %723 = vmatpush1.msra.mxu0 0.0
        %724 = vmatprep.subr.mxu0 0.0
        %725 = vmatpush1.msra.mxu0 0.0
        %726 = vmatprep.subr.mxu0 0.0
        %727 = vmatpush1.msra.mxu0 0.0
        %728 = vmatprep.subr.mxu0 0.0
        %729 = vmatpush1.msra.mxu0 0.0
        %730 = vmatprep.subr.mxu0 0.0
        %731 = vmatpush1.msra.mxu0 0.0
        %732 = vmatprep.subr.mxu0 0.0
        %733 = vmatpush1.msra.mxu0 0.0
        %734 = vmatprep.subr.mxu0 0.0
        %735 = vmatpush1.msra.mxu0 0.0
        %736 = vmatprep.subr.mxu0 0.0
        %737 = vmatpush1.msra.mxu0 0.0
        %738 = vmatprep.subr.mxu0 0.0
        %739 = vmatpush1.msra.mxu0 0.0
        %740 = vmatprep.subr.mxu0 0.0
        %741 = vmatpush1.msra.mxu0 0.0
        %742 = vmatprep.subr.mxu0 0.0
        %743 = vmatpush1.msra.mxu0 0.0
        %744 = vmatprep.subr.mxu0 0.0
        %745 = vmatpush1.msra.mxu0 0.0
        %746 = vmatprep.mubr.f32.mxu0 0.0
        %747 = vmatmul.mubr.f32.gmra.mrb[0].mxu0 %v677
        %v748 = vpop.f32.mrb[0].mxu0
        %v749 = vadd.f32 %v674, %v748
        %v750 = vpop.f32.mrb[0].mxu0
        %751 = vmatprep.mubr.f32.mxu0 0.0
        %752 = vmatmul.mubr.f32.gmra.mrb[0].mxu0 %v680
        %v753 = vpop.f32.mrb[0].mxu0
        %v754 = vadd.f32 %v674, %v753
        %v755 = vpop.f32.mrb[0].mxu0
        %756 = vdwg.mxu0
        %v757 = vmul.f32 %v749, 0.5
        %v758 = vmul.f32 %v754, 0.5
        %v759 = vtanh.pop %v757
        %v760 = vtanh.pop %v758
        %v761 = vadd.f32 %v759, 1.0
        %v762 = vadd.f32 %v760, 1.0
        %v763 = vmul.f32 %v761, 0.5
        %v764 = vmul.f32 %v762, 0.5
        %v765 = vpack.c.bf16 %v764, %v763
        %s766 = scalar_lea.vmem %s5, 16
        %v767 = vld [vmem:[%s766] sm:$0xf]
        %v768 = vld [vmem:[%s766 + $0x4] sm:$0xf]
        %v769 = vld [vmem:[%s766 + $0x8] sm:$0xf]
        %v770 = vld [vmem:[%s766 + $0xc] sm:$0xf]
        %v775 = vunpack.c.l.b16 %v767
        %v776 = vunpack.c.l.b16 %v768
        %v777 = vunpack.c.l.b16 %v769
        %v778 = vunpack.c.l.b16 %v770
        %v779 = vpack.c.b16 %v776, %v775
        %v780 = vpack.c.b16 %v778, %v777
        %vm783 = vcmask 261120
        %v785 = vsel %vm783, %v765, 0
        %787 = vmatprep.subr.bf16.mxu0 0
        %788 = vmatpush1.bf16.msra.mxu0 %v779
        %789 = vmatprep.subr.bf16.mxu0 0
        %790 = vmatpush1.bf16.msra.mxu0 %v780
        %791 = vmatprep.subr.bf16.mxu0 0
        %792 = vmatpush1.bf16.msra.mxu0 0
        %793 = vmatprep.subr.bf16.mxu0 0
        %794 = vmatpush1.bf16.msra.mxu0 0
        %795 = vmatprep.subr.bf16.mxu0 0
        %796 = vmatpush1.bf16.msra.mxu0 0
        %797 = vmatprep.subr.bf16.mxu0 0
        %798 = vmatpush1.bf16.msra.mxu0 0
        %799 = vmatprep.subr.bf16.mxu0 0
        %800 = vmatpush1.bf16.msra.mxu0 0
        %801 = vmatprep.subr.bf16.mxu0 0
        %802 = vmatpush1.bf16.msra.mxu0 0
        %803 = vmatprep.subr.bf16.mxu0 0
        %804 = vmatpush1.bf16.msra.mxu0 0
        %805 = vmatprep.subr.bf16.mxu0 0
        %806 = vmatpush1.bf16.msra.mxu0 0
        %807 = vmatprep.subr.bf16.mxu0 0
        %808 = vmatpush1.bf16.msra.mxu0 0
        %809 = vmatprep.subr.bf16.mxu0 0
        %810 = vmatpush1.bf16.msra.mxu0 0
        %811 = vmatprep.subr.bf16.mxu0 0
        %812 = vmatpush1.bf16.msra.mxu0 0
        %813 = vmatprep.subr.bf16.mxu0 0
        %814 = vmatpush1.bf16.msra.mxu0 0
        %815 = vmatprep.subr.bf16.mxu0 0
        %816 = vmatpush1.bf16.msra.mxu0 0
        %817 = vmatprep.subr.bf16.mxu0 0
        %818 = vmatpush1.bf16.msra.mxu0 0
        %819 = vmatprep.mubr.bf16.mxu0 0
        %820 = vmatmul.mubr.bf16.gmra.mrb[0].mxu0 %v785
        %v821 = vpop.f32.mrb[0].mxu0
        %v822 = vadd.f32 0.0, %v821
        %v823 = vpop.f32.mrb[0].mxu0
        %v824 = vpop.f32.mrb[0].mxu0
        %v825 = vadd.f32 0.0, %v824
        %v826 = vpop.f32.mrb[0].mxu0
        %827 = vdwg.mxu0
        %v832 = vunpack.c.l.b16 %v567
        %v833 = vunpack.c.l.b16 %v568
        %v834 = vunpack.c.l.b16 %v569
        %v835 = vunpack.c.l.b16 %v570
        %v836 = vpack.c.b16 %v833, %v832
        %v837 = vpack.c.b16 %v835, %v834
        %v841 = vsel %vm783, %v566, 0
        %843 = vmatprep.subr.bf16.mxu0 0
        %844 = vmatpush1.bf16.msra.mxu0 %v836
        %845 = vmatprep.subr.bf16.mxu0 0
        %846 = vmatpush1.bf16.msra.mxu0 %v837
        %847 = vmatprep.subr.bf16.mxu0 0
        %848 = vmatpush1.bf16.msra.mxu0 0
        %849 = vmatprep.subr.bf16.mxu0 0
        %850 = vmatpush1.bf16.msra.mxu0 0
        %851 = vmatprep.subr.bf16.mxu0 0
        %852 = vmatpush1.bf16.msra.mxu0 0
        %853 = vmatprep.subr.bf16.mxu0 0
        %854 = vmatpush1.bf16.msra.mxu0 0
        %855 = vmatprep.subr.bf16.mxu0 0
        %856 = vmatpush1.bf16.msra.mxu0 0
        %857 = vmatprep.subr.bf16.mxu0 0
        %858 = vmatpush1.bf16.msra.mxu0 0
        %859 = vmatprep.subr.bf16.mxu0 0
        %860 = vmatpush1.bf16.msra.mxu0 0
        %861 = vmatprep.subr.bf16.mxu0 0
        %862 = vmatpush1.bf16.msra.mxu0 0
        %863 = vmatprep.subr.bf16.mxu0 0
        %864 = vmatpush1.bf16.msra.mxu0 0
        %865 = vmatprep.subr.bf16.mxu0 0
        %866 = vmatpush1.bf16.msra.mxu0 0
        %867 = vmatprep.subr.bf16.mxu0 0
        %868 = vmatpush1.bf16.msra.mxu0 0
        %869 = vmatprep.subr.bf16.mxu0 0
        %870 = vmatpush1.bf16.msra.mxu0 0
        %871 = vmatprep.subr.bf16.mxu0 0
        %872 = vmatpush1.bf16.msra.mxu0 0
        %873 = vmatprep.subr.bf16.mxu0 0
        %874 = vmatpush1.bf16.msra.mxu0 0
        %875 = vmatprep.mubr.bf16.mxu0 0
        %876 = vmatmul.mubr.bf16.gmra.mrb[0].mxu0 %v841
        %v877 = vpop.f32.mrb[0].mxu0
        %v878 = vadd.f32 %v822, %v877
        %v879 = vpop.f32.mrb[0].mxu0
        %v880 = vpop.f32.mrb[0].mxu0
        %v881 = vadd.f32 %v825, %v880
        %v882 = vpop.f32.mrb[0].mxu0
        %883 = vdwg.mxu0
        %s884 = scalar_lea.vmem %s6, 1
        %v885 = vld [vmem:[%s884] sm:$0x1]
        %v887 = vsel %vm783, %v885, 0
        %889 = vmatprep.subr.bf16.mxu0 0
        %890 = vmatpush1.bf16.xpose.msra.mxu0 %v785
        %891 = vmatprep.subr.bf16.mxu0 0
        %892 = vmatpush1.bf16.xpose.msra.mxu0 0
        %893 = vmatprep.subr.bf16.mxu0 0
        %894 = vmatpush1.bf16.xpose.msra.mxu0 0
        %895 = vmatprep.subr.bf16.mxu0 0
        %896 = vmatpush1.bf16.xpose.msra.mxu0 0
        %897 = vmatprep.subr.bf16.mxu0 0
        %898 = vmatpush1.bf16.xpose.msra.mxu0 0
        %899 = vmatprep.subr.bf16.mxu0 0
        %900 = vmatpush1.bf16.xpose.msra.mxu0 0
        %901 = vmatprep.subr.bf16.mxu0 0
        %902 = vmatpush1.bf16.xpose.msra.mxu0 0
        %903 = vmatprep.subr.bf16.mxu0 0
        %904 = vmatpush1.bf16.xpose.msra.mxu0 0
        %905 = vmatprep.subr.bf16.mxu0 0
        %906 = vmatpush1.bf16.xpose.msra.mxu0 0
        %907 = vmatprep.subr.bf16.mxu0 0
        %908 = vmatpush1.bf16.xpose.msra.mxu0 0
        %909 = vmatprep.subr.bf16.mxu0 0
        %910 = vmatpush1.bf16.xpose.msra.mxu0 0
        %911 = vmatprep.subr.bf16.mxu0 0
        %912 = vmatpush1.bf16.xpose.msra.mxu0 0
        %913 = vmatprep.subr.bf16.mxu0 0
        %914 = vmatpush1.bf16.xpose.msra.mxu0 0
        %915 = vmatprep.subr.bf16.mxu0 0
        %916 = vmatpush1.bf16.xpose.msra.mxu0 0
        %917 = vmatprep.subr.bf16.mxu0 0
        %918 = vmatpush1.bf16.xpose.msra.mxu0 0
        %919 = vmatprep.subr.bf16.mxu0 0
        %920 = vmatpush1.bf16.xpose.msra.mxu0 0
        %921 = vmatprep.mubr.bf16.mxu0 0
        %922 = vmatmul.mubr.bf16.gmra.mrb[0].mxu0 %v887
        %v923 = vpop.f32.mrb[0].mxu0
        %v924 = vadd.f32 0.0, %v923
        %v925 = vpop.f32.mrb[0].mxu0
        %v926 = vpop.f32.mrb[0].mxu0
        %v927 = vpop.f32.mrb[0].mxu0
        %928 = vdwg.mxu0
        %v930 = vsel %vm783, %v571, 0
        %932 = vmatprep.subr.bf16.mxu0 0
        %933 = vmatpush1.bf16.xpose.msra.mxu0 %v841
        %934 = vmatprep.subr.bf16.mxu0 0
        %935 = vmatpush1.bf16.xpose.msra.mxu0 0
        %936 = vmatprep.subr.bf16.mxu0 0
        %937 = vmatpush1.bf16.xpose.msra.mxu0 0
        %938 = vmatprep.subr.bf16.mxu0 0
        %939 = vmatpush1.bf16.xpose.msra.mxu0 0
        %940 = vmatprep.subr.bf16.mxu0 0
        %941 = vmatpush1.bf16.xpose.msra.mxu0 0
        %942 = vmatprep.subr.bf16.mxu0 0
        %943 = vmatpush1.bf16.xpose.msra.mxu0 0
        %944 = vmatprep.subr.bf16.mxu0 0
        %945 = vmatpush1.bf16.xpose.msra.mxu0 0
        %946 = vmatprep.subr.bf16.mxu0 0
        %947 = vmatpush1.bf16.xpose.msra.mxu0 0
        %948 = vmatprep.subr.bf16.mxu0 0
        %949 = vmatpush1.bf16.xpose.msra.mxu0 0
        %950 = vmatprep.subr.bf16.mxu0 0
        %951 = vmatpush1.bf16.xpose.msra.mxu0 0
        %952 = vmatprep.subr.bf16.mxu0 0
        %953 = vmatpush1.bf16.xpose.msra.mxu0 0
        %954 = vmatprep.subr.bf16.mxu0 0
        %955 = vmatpush1.bf16.xpose.msra.mxu0 0
        %956 = vmatprep.subr.bf16.mxu0 0
        %957 = vmatpush1.bf16.xpose.msra.mxu0 0
        %958 = vmatprep.subr.bf16.mxu0 0
        %959 = vmatpush1.bf16.xpose.msra.mxu0 0
        %960 = vmatprep.subr.bf16.mxu0 0
        %961 = vmatpush1.bf16.xpose.msra.mxu0 0
        %962 = vmatprep.subr.bf16.mxu0 0
        %963 = vmatpush1.bf16.xpose.msra.mxu0 0
        %964 = vmatprep.mubr.bf16.mxu0 0
        %965 = vmatmul.mubr.bf16.gmra.mrb[0].mxu0 %v930
        %v966 = vpop.f32.mrb[0].mxu0
        %v967 = vadd.f32 %v924, %v966
        %v968 = vpop.f32.mrb[0].mxu0
        %v969 = vpop.f32.mrb[0].mxu0
        %v970 = vpop.f32.mrb[0].mxu0
        %971 = vdwg.mxu0
        %973 = vset.pattern.permute.xlu0 16
        %974 = vperm.xlu0 %973, %v878
        %v975 = vpop.permute.xlu0 %974
        %978 = vset.pattern.permute.xlu0 16
        %979 = vperm.xlu0 %978, %v881
        %v980 = vpop.permute.xlu0 %979
        %v982 = vlaneseq
        %v983 = vshrl.u32 %v982, 7
        %v984 = vsub.s32 0, %v983
        %v985 = vrot.slane %v967, %v984
        %v986 = vadd.f32 %v975, %v985
        %v987 = vadd.f32 %v980, %v985
        %vm988 = vcmp.ge.f32.partialorder %v986, 0.0
        %vm989 = vcmp.ge.f32.partialorder %v987, 0.0
        %v990 = vmul.f32 %v986, 0.2
        %v991 = vmul.f32 %v987, 0.2
        %v992 = vsel %vm988, %v986, %v990
        %v993 = vsel %vm989, %v987, %v991
        %v994 = vadd.f32 %v992, %v325
        %v995 = vadd.f32 %v993, %v326
        %v996 = vsel %vm328, %v994, -inf
        %997 = vmax.xlane.f32.xlu0 %v996
        %v998 = vpop.xlane.xlu0 %997
        %v999 = vsel %vm328, %v995, -inf
        %1000 = vmax.xlane.f32.xlu0 %v999
        %v1001 = vpop.xlane.xlu0 %1000
        %v1002 = vsub.f32 %v994, %v998
        %v1003 = vsub.f32 %v995, %v1001
        %v1004 = vmul.f32 %v1002, 1.442695
        %v1005 = vpow.pop %v1004
        %v1006 = vmul.f32 %v1003, 1.442695
        %v1007 = vpow.pop %v1006
        %v1008 = vsel %vm328, %v1005, 0.0
        %1009 = vadd.xlane.f32.xlu0 %v1008
        %v1010 = vpop.xlane.xlu0 %1009
        %v1011 = vsel %vm328, %v1007, 0.0
        %1012 = vadd.xlane.f32.xlu0 %v1011
        %v1013 = vpop.xlane.xlu0 %1012
        %v1014 = vrcp.pop %v1010
        %v1015 = vrcp.pop %v1013
        %v1016 = vmul.f32 %v1005, %v1014
        %v1017 = vmul.f32 %v1007, %v1015
        %v1018 = vld [vmem:[%s7] sm:$0x1]
        %v1020 = vlaneseq
        %v1021 = vshrl.u32 %v1020, 7
        %v1022 = vsub.s32 0, %v1021
        %v1023 = vrot.slane %v1018, %v1022
        %v1026 = vsel %vm328, %v1016, 0
        %v1029 = vsel %vm328, %v1017, 0
        %1031 = vmatprep.subr.mxu0 0.0
        %1032 = vmatpush1.msra.mxu0 %v878
        %1033 = vmatprep.subr.mxu0 0.0
        %1034 = vmatpush1.msra.mxu0 %v881
        %1035 = vmatprep.subr.mxu0 0.0
        %1036 = vmatpush1.msra.mxu0 0.0
        %1037 = vmatprep.subr.mxu0 0.0
        %1038 = vmatpush1.msra.mxu0 0.0
        %1039 = vmatprep.subr.mxu0 0.0
        %1040 = vmatpush1.msra.mxu0 0.0
        %1041 = vmatprep.subr.mxu0 0.0
        %1042 = vmatpush1.msra.mxu0 0.0
        %1043 = vmatprep.subr.mxu0 0.0
        %1044 = vmatpush1.msra.mxu0 0.0
        %1045 = vmatprep.subr.mxu0 0.0
        %1046 = vmatpush1.msra.mxu0 0.0
        %1047 = vmatprep.subr.mxu0 0.0
        %1048 = vmatpush1.msra.mxu0 0.0
        %1049 = vmatprep.subr.mxu0 0.0
        %1050 = vmatpush1.msra.mxu0 0.0
        %1051 = vmatprep.subr.mxu0 0.0
        %1052 = vmatpush1.msra.mxu0 0.0
        %1053 = vmatprep.subr.mxu0 0.0
        %1054 = vmatpush1.msra.mxu0 0.0
        %1055 = vmatprep.subr.mxu0 0.0
        %1056 = vmatpush1.msra.mxu0 0.0
        %1057 = vmatprep.subr.mxu0 0.0
        %1058 = vmatpush1.msra.mxu0 0.0
        %1059 = vmatprep.subr.mxu0 0.0
        %1060 = vmatpush1.msra.mxu0 0.0
        %1061 = vmatprep.subr.mxu0 0.0
        %1062 = vmatpush1.msra.mxu0 0.0
        %1063 = vmatprep.subr.mxu0 0.0
        %1064 = vmatpush1.msra.mxu0 0.0
        %1065 = vmatprep.subr.mxu0 0.0
        %1066 = vmatpush1.msra.mxu0 0.0
        %1067 = vmatprep.subr.mxu0 0.0
        %1068 = vmatpush1.msra.mxu0 0.0
        %1069 = vmatprep.subr.mxu0 0.0
        %1070 = vmatpush1.msra.mxu0 0.0
        %1071 = vmatprep.subr.mxu0 0.0
        %1072 = vmatpush1.msra.mxu0 0.0
        %1073 = vmatprep.subr.mxu0 0.0
        %1074 = vmatpush1.msra.mxu0 0.0
        %1075 = vmatprep.subr.mxu0 0.0
        %1076 = vmatpush1.msra.mxu0 0.0
        %1077 = vmatprep.subr.mxu0 0.0
        %1078 = vmatpush1.msra.mxu0 0.0
        %1079 = vmatprep.subr.mxu0 0.0
        %1080 = vmatpush1.msra.mxu0 0.0
        %1081 = vmatprep.subr.mxu0 0.0
        %1082 = vmatpush1.msra.mxu0 0.0
        %1083 = vmatprep.subr.mxu0 0.0
        %1084 = vmatpush1.msra.mxu0 0.0
        %1085 = vmatprep.subr.mxu0 0.0
        %1086 = vmatpush1.msra.mxu0 0.0
        %1087 = vmatprep.subr.mxu0 0.0
        %1088 = vmatpush1.msra.mxu0 0.0
        %1089 = vmatprep.subr.mxu0 0.0
        %1090 = vmatpush1.msra.mxu0 0.0
        %1091 = vmatprep.subr.mxu0 0.0
        %1092 = vmatpush1.msra.mxu0 0.0
        %1093 = vmatprep.subr.mxu0 0.0
        %1094 = vmatpush1.msra.mxu0 0.0
        %1095 = vmatprep.mubr.f32.mxu0 0.0
        %1096 = vmatmul.mubr.f32.gmra.mrb[0].mxu0 %v1026
        %v1097 = vpop.f32.mrb[0].mxu0
        %v1098 = vadd.f32 %v1023, %v1097
        %v1099 = vpop.f32.mrb[0].mxu0
        %1100 = vmatprep.mubr.f32.mxu0 0.0
        %1101 = vmatmul.mubr.f32.gmra.mrb[0].mxu0 %v1029
        %v1102 = vpop.f32.mrb[0].mxu0
        %v1103 = vadd.f32 %v1023, %v1102
        %v1104 = vpop.f32.mrb[0].mxu0
        %1105 = vdwg.mxu0
        %v1106 = vmul.f32 %v1098, 0.5
        %v1107 = vmul.f32 %v1103, 0.5
        %v1108 = vtanh.pop %v1106
        %v1109 = vtanh.pop %v1107
        %v1110 = vadd.f32 %v1108, 1.0
        %v1111 = vadd.f32 %v1109, 1.0
        %v1112 = vmul.f32 %v1110, 0.5
        %v1113 = vmul.f32 %v1111, 0.5
        %1114 = vst.msk [vmem:[%s313] sm:$0xff] %vm328, %v1112
        %1115 = vst.msk [vmem:[%s313 + $0x8] sm:$0xff] %vm328, %v1113
        %s1116 = sand.u32 %s204, 1
        %s1117 = scalar_lea.sflag [#allocation4], %s1116
        %s1118 = sand.u32 %s204, 1
        %s1119 = smul.addr %s1118, 16
        %s1120 = scalar_lea.vmem [#allocation5], %s1119
        // Predicated region
        $region57: #{tpu_custom_call.1} parent=51 // pred_check
          %p1121 = pneg %p214
        $region58: #{tpu_custom_call.1} parent=51 // pred_check_branch
          %1123 = sbr.rel (%p1121) target = $region60
        $region59: #{tpu_custom_call.1} parent=51 // pred_region
          %s1125 = ssub.s32 256, 256
          %1126 = vsyncadd %s1117, %s1125
          %s1127 = smul.addr %s23, 2
          %s1128 = smul.addr %s1127, 128
          %s1129 = scalar_lea.hbm %s8, %s1128
          %s1130 = sshll.u32 %s1120, 4
          %s1131 = int_to_ptr.vmem [resolvable:$true] %s1130
          %1136 = dma.vmem_to_hbm [thread:$0]  %s1131, 256, %s1129, %s1117, 128, 128, 8
        $region60: #{tpu_custom_call.1} parent=51 // pred_fallthru
          _
      $region52: #{tpu_custom_call.1} parent=5 // pred_fallthru
        _
      %p1137 = scmp.le.s32.totalorder 2, %s18
      // Predicated region
      $region61: #{tpu_custom_call.1} parent=5 // pred_check
        %p1138 = pneg %p1137
      $region62: #{tpu_custom_call.1} parent=5 // pred_check_branch
        %1140 = sbr.rel (%p1138) target = $region64
      $region63: #{tpu_custom_call.1} parent=5 // pred_region
        %s1141 = ssub.s32 %s18, 2
        // Predicated region
        $region65: #{tpu_custom_call.1} parent=63 // pred_check
          %p1142 = pneg %p220
        $region66: #{tpu_custom_call.1} parent=63 // pred_check_branch
          %1144 = sbr.rel (%p1142) target = $region68
        $region67: #{tpu_custom_call.1} parent=63 // pred_region
          %s1145 = sand.u32 %s205, 1
          %s1146 = scalar_lea.sflag [#allocation4], %s1145
          %s1147 = sand.u32 %s205, 1
          %s1148 = smul.addr %s1147, 16
          %s1149 = scalar_lea.vmem [#allocation5], %s1148
          %1150 = dma.done %s1146, 256
        $region68: #{tpu_custom_call.1} parent=63 // pred_fallthru
          _
      $region64: #{tpu_custom_call.1} parent=5 // pred_fallthru
        _
    $region6: #{tpu_custom_call.1} parent=1 // loop_footer
      %s22 = sadd.s32 1, %s18
    $region7: #{tpu_custom_call.1} parent=1 // loop_footer_branch
      %17 = sbr.rel target = $region3
    $region8: #{tpu_custom_call.1} parent=1 // loop_exit
      _
    %1151 = vsyncpa [#allocation3], 1
    %s1152 = scalar_lea.sflag [#allocation3], 1
    %1153 = vsyncpa %s1152, 1
    %1154 = vsyncpa [#allocation4], 1
    %s1155 = scalar_lea.sflag [#allocation4], 1
    %1156 = vsyncpa %s1155, 1

</llo_original>
